<compile_context>
chip_gen: v7x
topology: tpu7x:2x2x1
jax: 0.10.0
libtpu: 0.0.40
codegen_flags: <defaults>
</compile_context>

<pallas_src>
import functools

import numpy as np
import jax
import jax.numpy as jnp
from jax import lax
from jax.experimental import pallas as pl
from jax.experimental.pallas import tpu as pltpu

# ----------------------------- problem sizes --------------------------------
NF = 2        # frames
NALL = 16     # extended atoms per frame
NLOC = 8      # local atoms per frame
NSEL = 4      # neighbors per local atom
NTYPES = 3    # number of atom types (len(type_map))

# BaseAtomicModel static configuration (baked into the kernel at trace time)
ATOM_EXCLUDE_TYPES = (2,)          # atom_exclude_types
PAIR_EXCLUDE_TYPES = ((0, 1),)     # pair_exclude_types


def _sym_pairs(pairs):
    s = set()
    for a, b in pairs:
        s.add((a, b))
        s.add((b, a))
    return tuple(sorted(s))


SYM_PAIRS = _sym_pairs(PAIR_EXCLUDE_TYPES)


# ------------------------------- Pallas kernel ------------------------------
def base_atomic_kernel(loc_ref, feat_ref, nlist_ref, wb_ref, out_ref, *,
                       nf, nloc, nall, ntypes, sym_pairs, atom_exclude_types):
    f32, i32 = jnp.float32, jnp.int32
    P = loc_ref.shape[1]             # padded lane count (multiple of 128)
    na = feat_ref.shape[1]           # nf * nall extended atoms
    nsel = nlist_ref.shape[0]
    nt2 = ntypes * ntypes

    loc = loc_ref[...]               # (4, P) rows: [type, x, y, z]; type < 0 = virtual/pad
    ti = loc[0:1, :]
    xi = loc[1:2, :]
    yi = loc[2:3, :]
    zi = loc[3:4, :]

    feat = feat_ref[...]             # (4, na) rows: [type, x, y, z] extended

    # per-frame extended-index offset, branch-free (no integer division); padded lanes
    # get an oversized offset but their nlist entries are -1 so it is never used.
    lane = lax.broadcasted_iota(i32, (1, P), 1)
    frame_off = jnp.zeros((1, P), i32)
    for f in range(1, nf):
        frame_off = frame_off + jnp.where(lane >= f * nloc, nall, 0)

    e_acc = jnp.zeros((1, P), f32)

    # static unroll over neighbor slots: one small gather dot + VPU math per slot
    for j in range(nsel):
        nl_j = nlist_ref[j:j + 1, :]                       # (1, P) int32, -1 = no neighbor
        valid = nl_j >= 0
        nl_g = jnp.where(valid, nl_j + frame_off, -1)      # global extended index

        # gather [type, x, y, z] of neighbor j with one (4,na)@(na,P) MXU dot;
        # precision=HIGHEST keeps the gathered f32 coordinates exact.
        oh = (lax.broadcasted_iota(i32, (na, P), 0) == nl_g).astype(f32)
        g = jnp.dot(feat, oh, preferred_element_type=f32,
                    precision=lax.Precision.HIGHEST)
        tn = g[0:1, :]
        xn = g[1:2, :]
        yn = g[2:3, :]
        zn = g[3:4, :]

        # pair exclusion: nlist = where(pair_mask == 1, nlist, -1)  (compare raw types)
        keep = valid
        for (ta, tb) in sym_pairs:
            hit = jnp.logical_and(ti == float(ta), tn == float(tb))
            keep = jnp.logical_and(keep, jnp.logical_not(hit))

        # toy forward_atomic contribution: w_pair[t_i, t_j] / (1 + r_ij^2)
        dx = xn - xi
        dy = yn - yi
        dz = zn - zi
        x = 1.0 + dx * dx + dy * dy + dz * dz
        y = pl.reciprocal(x, approx=True)     # EUP slot
        y = y * (2.0 - x * y)                 # one Newton step -> ~f32 accuracy
        sw = keep.astype(f32) * y

        # w_pair lookup: compare+select chain against SMEM scalars (types masked to >= 0,
        # matching the masked atype passed to forward_atomic in the reference module)
        comb = jnp.maximum(ti, 0.0) * float(ntypes) + jnp.maximum(tn, 0.0)
        wij = jnp.zeros((1, P), f32)
        for k in range(nt2):
            wij = jnp.where(comb == float(k), wb_ref[k], wij)

        e_acc = e_acc + wij * sw

    # apply_out_stat: ret += out_bias[atype]  (select chain, SMEM scalars)
    bias_i = jnp.zeros((1, P), f32)
    for t in range(ntypes):
        bias_i = jnp.where(ti == float(t), wb_ref[nt2 + t], bias_i)
    e = e_acc + bias_i

    # atom mask: real atoms * atom-exclude mask
    amask = ti >= 0.0
    for te in atom_exclude_types:
        amask = jnp.logical_and(amask, ti != float(te))
    amask_f = amask.astype(f32)

    # single fused lane-dense store: row 0 = energy, row 1 = mask (cast outside)
    out_ref[...] = jnp.concatenate([e * amask_f, amask_f], axis=0)


# ------------------------------- wrapper -------------------------------------
def base_atomic_model_forward(extended_coord, extended_atype, nlist, out_bias, w_pair):
    """Pallas equivalent of BaseAtomicModel.forward_common_atomic.

    extended_coord: nf x (nall*3); extended_atype: nf x nall (<0 = virtual);
    nlist: nf x nloc x nsel (-1 = no neighbor).
    Returns {"energy": (nf, nloc, 1) f32, "mask": (nf, nloc) int32}.
    """
    nf, nall = extended_atype.shape
    nloc, nsel = nlist.shape[1], nlist.shape[2]
    ntypes = w_pair.shape[0]
    assert out_bias.shape[1] == ntypes
    # TODO(synk): assumes a single scalar output key (n_out == 1, max_out_size == 1),
    # same as the pure-JAX reference; generalize per output key before production use.
    pl_n = nf * nloc
    P = ((pl_n + 127) // 128) * 128           # lane-dense padding (multiple of 128)
    na = nf * nall

    coord = extended_coord.reshape(nf, nall, 3).astype(jnp.float32)

    # extended-atom slab (one DMA): rows [type, x, y, z], columns n = f*nall + a
    feat = jnp.concatenate(
        [extended_atype.astype(jnp.float32).reshape(1, na),
         coord.transpose(2, 0, 1).reshape(3, na)], axis=0)               # (4, na)

    # local-atom slab (first nloc extended atoms per frame), columns q = f*nloc + i
    loc = jnp.concatenate(
        [extended_atype[:, :nloc].astype(jnp.float32).reshape(1, pl_n),
         coord[:, :nloc, :].transpose(2, 0, 1).reshape(3, pl_n)], axis=0)
    loc = jnp.pad(loc, ((0, 0), (0, P - pl_n)), constant_values=-1.0)    # (4, P)

    # nlist with nsel on sublanes, local-atom lanes padded; frame offset added in-kernel
    nl = nlist.astype(jnp.int32).transpose(2, 0, 1).reshape(nsel, pl_n)
    nl = jnp.pad(nl, ((0, 0), (0, P - pl_n)), constant_values=-1)        # (nsel, P)

    # pack w_pair + out_bias into one small SMEM row
    bias_vec = out_bias.astype(jnp.float32).reshape(out_bias.shape[0], ntypes, -1)[0, :, 0]
    wb = jnp.concatenate([w_pair.astype(jnp.float32).reshape(-1), bias_vec])  # (nt2+ntypes,)

    kernel = functools.partial(
        base_atomic_kernel, nf=nf, nloc=nloc, nall=nall, ntypes=ntypes,
        sym_pairs=SYM_PAIRS, atom_exclude_types=tuple(ATOM_EXCLUDE_TYPES))

    vmem = lambda: pl.BlockSpec(memory_space=pltpu.MemorySpace.VMEM)
    out = pl.pallas_call(
        kernel,
        out_shape=jax.ShapeDtypeStruct((2, P), jnp.float32),
        in_specs=[vmem(), vmem(), vmem(),
                  pl.BlockSpec(memory_space=pltpu.MemorySpace.SMEM)],
        out_specs=vmem(),
    )(loc, feat, nl, wb)

    energy = out[0, :pl_n].reshape(nf, nloc)[:, :, None]
    mask = out[1, :pl_n].reshape(nf, nloc).astype(jnp.int32)
    return {"energy": energy, "mask": mask}


# --------------------------- pure-JAX reference ------------------------------
def reference_forward(extended_coord, extended_atype, nlist, out_bias, w_pair):
    nf, nall = extended_atype.shape
    nloc, nsel = nlist.shape[1], nlist.shape[2]
    coord = extended_coord.reshape(nf, nall, 3)
    atype = extended_atype[:, :nloc]

    gather = jax.vmap(lambda a, i: a[i])
    idx = jnp.clip(nlist, 0, nall - 1)
    nt_raw = gather(extended_atype, idx)                    # (nf, nloc, nsel)
    valid = nlist >= 0
    keep = valid
    for (ta, tb) in SYM_PAIRS:
        keep = keep & ~((atype[:, :, None] == ta) & (nt_raw == tb))
    nlist_eff = jnp.where(keep, nlist, -1)

    ext_mask = extended_atype >= 0
    atype_m = jnp.where(ext_mask, extended_atype, 0)
    atype_loc_m = atype_m[:, :nloc]
    valid_eff = nlist_eff >= 0
    idx_eff = jnp.clip(nlist_eff, 0, nall - 1)
    nt_m = jnp.where(valid_eff, gather(atype_m, idx_eff), 0)
    nbr_c = gather(coord, idx_eff)                          # (nf, nloc, nsel, 3)
    diff = nbr_c - coord[:, :nloc, None, :]
    r2 = jnp.sum(diff * diff, axis=-1)
    sw = jnp.where(valid_eff, 1.0 / (1.0 + r2), 0.0)
    wij = w_pair[atype_loc_m[:, :, None], nt_m]
    e_raw = jnp.sum(wij * sw, axis=-1, keepdims=True)

    bias_vec = out_bias.reshape(out_bias.shape[0], -1)[0]   # (ntypes,)
    e = e_raw + bias_vec[atype_loc_m][:, :, None]

    amask = (atype >= 0).astype(jnp.int32)
    for te in ATOM_EXCLUDE_TYPES:
        amask = amask * (atype != te).astype(jnp.int32)
    return {"energy": e * amask[:, :, None].astype(jnp.float32), "mask": amask}


# ----------------------------------- main ------------------------------------
if __name__ == "__main__":
    key = jax.random.PRNGKey(0)
    k1, k2, k3 = jax.random.split(key, 3)

    extended_coord = (jax.random.uniform(k1, (NF, NALL, 3), jnp.float32) * 4.0
                      ).reshape(NF, NALL * 3)                       # nf x (nall*3)
    extended_atype = jax.random.randint(k2, (NF, NALL), 0, NTYPES, dtype=jnp.int32)
    # mark some atoms as virtual (type < 0), including one local atom per frame
    extended_atype = extended_atype.at[:, NLOC - 1].set(-1)
    extended_atype = extended_atype.at[:, NALL - 2:].set(-1)
    nlist = jax.random.randint(k3, (NF, NLOC, NSEL), -1, NALL, dtype=jnp.int32)

    # deterministic buffers / params:
    # out_bias registered buffer has shape (n_out, ntypes, max_out_size) = (1, ntypes, 1)
    out_bias = (jnp.arange(NTYPES, dtype=jnp.float32) * 0.5 + 0.1).reshape(1, NTYPES, 1)
    # toy forward_atomic per-type-pair weight
    w_pair = ((jnp.arange(NTYPES * NTYPES, dtype=jnp.float32) + 1.0) / 10.0).reshape(NTYPES, NTYPES)

    out = base_atomic_model_forward(extended_coord, extended_atype, nlist, out_bias, w_pair)
    out = jax.block_until_ready(out)

    ref = reference_forward(extended_coord, extended_atype, nlist, out_bias, w_pair)
    np.testing.assert_allclose(np.asarray(out["energy"]), np.asarray(ref["energy"]),
                               rtol=1e-5, atol=1e-5)
    np.testing.assert_array_equal(np.asarray(out["mask"]), np.asarray(ref["mask"]))

    print("KERNEL_OK")
</pallas_src>

<mosaic_0001>
module attributes {stable_mosaic.version = 11 : i64} {
  func.func @base_atomic_kernel(%arg0: memref<4x128xf32, #tpu.memory_space<vmem>>, %arg1: memref<4x32xf32, #tpu.memory_space<vmem>>, %arg2: memref<4x128xi32, #tpu.memory_space<vmem>>, %arg3: memref<12xf32, #tpu.memory_space<smem>>, %arg4: memref<2x128xf32, #tpu.memory_space<vmem>>) attributes {dimension_semantics = [], scalar_prefetch = 0 : i64, scratch_operands = 0 : i64, tpu.core_type = #tpu.core_type<tc>} {
    %c0 = arith.constant 0 : index
    %c0_0 = arith.constant 0 : index
    %0 = vector.load %arg0[%c0, %c0_0] : memref<4x128xf32, #tpu.memory_space<vmem>>, vector<4x128xf32>
    %1 = vector.extract_strided_slice %0 {offsets = [0, 0], sizes = [1, 128], strides = [1, 1]} : vector<4x128xf32> to vector<1x128xf32>
    %2 = vector.extract_strided_slice %0 {offsets = [1, 0], sizes = [1, 128], strides = [1, 1]} : vector<4x128xf32> to vector<1x128xf32>
    %3 = vector.extract_strided_slice %0 {offsets = [2, 0], sizes = [1, 128], strides = [1, 1]} : vector<4x128xf32> to vector<1x128xf32>
    %4 = vector.extract_strided_slice %0 {offsets = [3, 0], sizes = [1, 128], strides = [1, 1]} : vector<4x128xf32> to vector<1x128xf32>
    %c0_1 = arith.constant 0 : index
    %c0_2 = arith.constant 0 : index
    %5 = vector.load %arg1[%c0_1, %c0_2] : memref<4x32xf32, #tpu.memory_space<vmem>>, vector<4x32xf32>
    %6 = tpu.iota {dimensions = array<i32: 1>} : vector<1x128xi32>
    %c0_i32 = arith.constant 0 : i32
    %7 = vector.broadcast %c0_i32 : i32 to vector<1x128xi32>
    %c8_i32 = arith.constant 8 : i32
    %8 = vector.broadcast %c8_i32 : i32 to vector<1x128xi32>
    %9 = arith.cmpi sge, %6, %8 : vector<1x128xi32>
    %c16_i32 = arith.constant 16 : i32
    %c0_i32_3 = arith.constant 0 : i32
    %10 = vector.broadcast %c16_i32 : i32 to vector<1x128xi32>
    %11 = vector.broadcast %c0_i32_3 : i32 to vector<1x128xi32>
    %12 = arith.select %9, %10, %11 : vector<1x128xi1>, vector<1x128xi32>
    %13 = arith.addi %7, %12 : vector<1x128xi32>
    %cst = arith.constant 0.000000e+00 : f32
    %14 = vector.broadcast %cst : f32 to vector<1x128xf32>
    %c0_4 = arith.constant 0 : index
    %c0_5 = arith.constant 0 : index
    %15 = vector.load %arg2[%c0_4, %c0_5] : memref<4x128xi32, #tpu.memory_space<vmem>>, vector<1x128xi32>
    %c0_i32_6 = arith.constant 0 : i32
    %16 = vector.broadcast %c0_i32_6 : i32 to vector<1x128xi32>
    %17 = arith.cmpi sge, %15, %16 : vector<1x128xi32>
    %18 = arith.addi %15, %13 : vector<1x128xi32>
    %c-1_i32 = arith.constant -1 : i32
    %19 = vector.broadcast %c-1_i32 : i32 to vector<1x128xi32>
    %20 = arith.select %17, %18, %19 : vector<1x128xi1>, vector<1x128xi32>
    %21 = tpu.iota {dimensions = array<i32: 0>} : vector<32x128xi32>
    %22 = vector.broadcast %20 : vector<1x128xi32> to vector<32x128xi32>
    %23 = arith.cmpi eq, %21, %22 : vector<32x128xi32>
    %24 = arith.extui %23 : vector<32x128xi1> to vector<32x128xi32>
    %25 = arith.sitofp %24 : vector<32x128xi32> to vector<32x128xf32>
    %cst_7 = arith.constant dense<0.000000e+00> : vector<4x128xf32>
    %26 = tpu.matmul %5, %25, %cst_7 {dimension_numbers = #tpu.dot_dimension_numbers<[1], [0], [0], [1], [0, 0, 1, 1], [], []>, precision = #tpu.contract_precision<fp32>} : vector<4x32xf32>, vector<32x128xf32>, vector<4x128xf32> -> vector<4x128xf32>
    %27 = vector.extract_strided_slice %26 {offsets = [0, 0], sizes = [1, 128], strides = [1, 1]} : vector<4x128xf32> to vector<1x128xf32>
    %28 = vector.extract_strided_slice %26 {offsets = [1, 0], sizes = [1, 128], strides = [1, 1]} : vector<4x128xf32> to vector<1x128xf32>
    %29 = vector.extract_strided_slice %26 {offsets = [2, 0], sizes = [1, 128], strides = [1, 1]} : vector<4x128xf32> to vector<1x128xf32>
    %30 = vector.extract_strided_slice %26 {offsets = [3, 0], sizes = [1, 128], strides = [1, 1]} : vector<4x128xf32> to vector<1x128xf32>
    %cst_8 = arith.constant 0.000000e+00 : f32
    %31 = vector.broadcast %cst_8 : f32 to vector<1x128xf32>
    %32 = arith.cmpf oeq, %1, %31 : vector<1x128xf32>
    %cst_9 = arith.constant 1.000000e+00 : f32
    %33 = vector.broadcast %cst_9 : f32 to vector<1x128xf32>
    %34 = arith.cmpf oeq, %27, %33 : vector<1x128xf32>
    %35 = arith.andi %32, %34 : vector<1x128xi1>
    %cst_10 = arith.constant dense<true> : vector<1x128xi1>
    %36 = arith.xori %35, %cst_10 : vector<1x128xi1>
    %37 = arith.andi %17, %36 : vector<1x128xi1>
    %cst_11 = arith.constant 1.000000e+00 : f32
    %38 = vector.broadcast %cst_11 : f32 to vector<1x128xf32>
    %39 = arith.cmpf oeq, %1, %38 : vector<1x128xf32>
    %cst_12 = arith.constant 0.000000e+00 : f32
    %40 = vector.broadcast %cst_12 : f32 to vector<1x128xf32>
    %41 = arith.cmpf oeq, %27, %40 : vector<1x128xf32>
    %42 = arith.andi %39, %41 : vector<1x128xi1>
    %cst_13 = arith.constant dense<true> : vector<1x128xi1>
    %43 = arith.xori %42, %cst_13 : vector<1x128xi1>
    %44 = arith.andi %37, %43 : vector<1x128xi1>
    %45 = arith.subf %28, %2 : vector<1x128xf32>
    %46 = arith.subf %29, %3 : vector<1x128xf32>
    %47 = arith.subf %30, %4 : vector<1x128xf32>
    %48 = arith.mulf %45, %45 : vector<1x128xf32>
    %cst_14 = arith.constant 1.000000e+00 : f32
    %49 = vector.broadcast %cst_14 : f32 to vector<1x128xf32>
    %50 = arith.addf %49, %48 : vector<1x128xf32>
    %51 = arith.mulf %46, %46 : vector<1x128xf32>
    %52 = arith.addf %50, %51 : vector<1x128xf32>
    %53 = arith.mulf %47, %47 : vector<1x128xf32>
    %54 = arith.addf %52, %53 : vector<1x128xf32>
    %55 = tpu.reciprocal %54 {approx = true} : vector<1x128xf32> -> vector<1x128xf32>
    %56 = arith.mulf %54, %55 : vector<1x128xf32>
    %cst_15 = arith.constant 2.000000e+00 : f32
    %57 = vector.broadcast %cst_15 : f32 to vector<1x128xf32>
    %58 = arith.subf %57, %56 : vector<1x128xf32>
    %59 = arith.mulf %55, %58 : vector<1x128xf32>
    %60 = arith.extui %44 : vector<1x128xi1> to vector<1x128xi32>
    %61 = arith.sitofp %60 : vector<1x128xi32> to vector<1x128xf32>
    %62 = arith.mulf %61, %59 : vector<1x128xf32>
    %cst_16 = arith.constant 0.000000e+00 : f32
    %63 = vector.broadcast %cst_16 : f32 to vector<1x128xf32>
    %64 = arith.maximumf %1, %63 : vector<1x128xf32>
    %cst_17 = arith.constant 3.000000e+00 : f32
    %65 = vector.broadcast %cst_17 : f32 to vector<1x128xf32>
    %66 = arith.mulf %64, %65 : vector<1x128xf32>
    %cst_18 = arith.constant 0.000000e+00 : f32
    %67 = vector.broadcast %cst_18 : f32 to vector<1x128xf32>
    %68 = arith.maximumf %27, %67 : vector<1x128xf32>
    %69 = arith.addf %66, %68 : vector<1x128xf32>
    %cst_19 = arith.constant 0.000000e+00 : f32
    %70 = vector.broadcast %cst_19 : f32 to vector<1x128xf32>
    %cst_20 = arith.constant 0.000000e+00 : f32
    %71 = vector.broadcast %cst_20 : f32 to vector<1x128xf32>
    %72 = arith.cmpf oeq, %69, %71 : vector<1x128xf32>
    %c0_21 = arith.constant 0 : index
    %73 = memref.load %arg3[%c0_21] : memref<12xf32, #tpu.memory_space<smem>>
    %74 = vector.broadcast %73 : f32 to vector<1x128xf32>
    %75 = arith.select %72, %74, %70 : vector<1x128xi1>, vector<1x128xf32>
    %cst_22 = arith.constant 1.000000e+00 : f32
    %76 = vector.broadcast %cst_22 : f32 to vector<1x128xf32>
    %77 = arith.cmpf oeq, %69, %76 : vector<1x128xf32>
    %c1 = arith.constant 1 : index
    %78 = memref.load %arg3[%c1] : memref<12xf32, #tpu.memory_space<smem>>
    %79 = vector.broadcast %78 : f32 to vector<1x128xf32>
    %80 = arith.select %77, %79, %75 : vector<1x128xi1>, vector<1x128xf32>
    %cst_23 = arith.constant 2.000000e+00 : f32
    %81 = vector.broadcast %cst_23 : f32 to vector<1x128xf32>
    %82 = arith.cmpf oeq, %69, %81 : vector<1x128xf32>
    %c2 = arith.constant 2 : index
    %83 = memref.load %arg3[%c2] : memref<12xf32, #tpu.memory_space<smem>>
    %84 = vector.broadcast %83 : f32 to vector<1x128xf32>
    %85 = arith.select %82, %84, %80 : vector<1x128xi1>, vector<1x128xf32>
    %cst_24 = arith.constant 3.000000e+00 : f32
    %86 = vector.broadcast %cst_24 : f32 to vector<1x128xf32>
    %87 = arith.cmpf oeq, %69, %86 : vector<1x128xf32>
    %c3 = arith.constant 3 : index
    %88 = memref.load %arg3[%c3] : memref<12xf32, #tpu.memory_space<smem>>
    %89 = vector.broadcast %88 : f32 to vector<1x128xf32>
    %90 = arith.select %87, %89, %85 : vector<1x128xi1>, vector<1x128xf32>
    %cst_25 = arith.constant 4.000000e+00 : f32
    %91 = vector.broadcast %cst_25 : f32 to vector<1x128xf32>
    %92 = arith.cmpf oeq, %69, %91 : vector<1x128xf32>
    %c4 = arith.constant 4 : index
    %93 = memref.load %arg3[%c4] : memref<12xf32, #tpu.memory_space<smem>>
    %94 = vector.broadcast %93 : f32 to vector<1x128xf32>
    %95 = arith.select %92, %94, %90 : vector<1x128xi1>, vector<1x128xf32>
    %cst_26 = arith.constant 5.000000e+00 : f32
    %96 = vector.broadcast %cst_26 : f32 to vector<1x128xf32>
    %97 = arith.cmpf oeq, %69, %96 : vector<1x128xf32>
    %c5 = arith.constant 5 : index
    %98 = memref.load %arg3[%c5] : memref<12xf32, #tpu.memory_space<smem>>
    %99 = vector.broadcast %98 : f32 to vector<1x128xf32>
    %100 = arith.select %97, %99, %95 : vector<1x128xi1>, vector<1x128xf32>
    %cst_27 = arith.constant 6.000000e+00 : f32
    %101 = vector.broadcast %cst_27 : f32 to vector<1x128xf32>
    %102 = arith.cmpf oeq, %69, %101 : vector<1x128xf32>
    %c6 = arith.constant 6 : index
    %103 = memref.load %arg3[%c6] : memref<12xf32, #tpu.memory_space<smem>>
    %104 = vector.broadcast %103 : f32 to vector<1x128xf32>
    %105 = arith.select %102, %104, %100 : vector<1x128xi1>, vector<1x128xf32>
    %cst_28 = arith.constant 7.000000e+00 : f32
    %106 = vector.broadcast %cst_28 : f32 to vector<1x128xf32>
    %107 = arith.cmpf oeq, %69, %106 : vector<1x128xf32>
    %c7 = arith.constant 7 : index
    %108 = memref.load %arg3[%c7] : memref<12xf32, #tpu.memory_space<smem>>
    %109 = vector.broadcast %108 : f32 to vector<1x128xf32>
    %110 = arith.select %107, %109, %105 : vector<1x128xi1>, vector<1x128xf32>
    %cst_29 = arith.constant 8.000000e+00 : f32
    %111 = vector.broadcast %cst_29 : f32 to vector<1x128xf32>
    %112 = arith.cmpf oeq, %69, %111 : vector<1x128xf32>
    %c8 = arith.constant 8 : index
    %113 = memref.load %arg3[%c8] : memref<12xf32, #tpu.memory_space<smem>>
    %114 = vector.broadcast %113 : f32 to vector<1x128xf32>
    %115 = arith.select %112, %114, %110 : vector<1x128xi1>, vector<1x128xf32>
    %116 = arith.mulf %115, %62 : vector<1x128xf32>
    %117 = arith.addf %14, %116 : vector<1x128xf32>
    %c1_30 = arith.constant 1 : index
    %c0_31 = arith.constant 0 : index
    %118 = vector.load %arg2[%c1_30, %c0_31] : memref<4x128xi32, #tpu.memory_space<vmem>>, vector<1x128xi32>
    %c0_i32_32 = arith.constant 0 : i32
    %119 = vector.broadcast %c0_i32_32 : i32 to vector<1x128xi32>
    %120 = arith.cmpi sge, %118, %119 : vector<1x128xi32>
    %121 = arith.addi %118, %13 : vector<1x128xi32>
    %c-1_i32_33 = arith.constant -1 : i32
    %122 = vector.broadcast %c-1_i32_33 : i32 to vector<1x128xi32>
    %123 = arith.select %120, %121, %122 : vector<1x128xi1>, vector<1x128xi32>
    %124 = tpu.iota {dimensions = array<i32: 0>} : vector<32x128xi32>
    %125 = vector.broadcast %123 : vector<1x128xi32> to vector<32x128xi32>
    %126 = arith.cmpi eq, %124, %125 : vector<32x128xi32>
    %127 = arith.extui %126 : vector<32x128xi1> to vector<32x128xi32>
    %128 = arith.sitofp %127 : vector<32x128xi32> to vector<32x128xf32>
    %cst_34 = arith.constant dense<0.000000e+00> : vector<4x128xf32>
    %129 = tpu.matmul %5, %128, %cst_34 {dimension_numbers = #tpu.dot_dimension_numbers<[1], [0], [0], [1], [0, 0, 1, 1], [], []>, precision = #tpu.contract_precision<fp32>} : vector<4x32xf32>, vector<32x128xf32>, vector<4x128xf32> -> vector<4x128xf32>
    %130 = vector.extract_strided_slice %129 {offsets = [0, 0], sizes = [1, 128], strides = [1, 1]} : vector<4x128xf32> to vector<1x128xf32>
    %131 = vector.extract_strided_slice %129 {offsets = [1, 0], sizes = [1, 128], strides = [1, 1]} : vector<4x128xf32> to vector<1x128xf32>
    %132 = vector.extract_strided_slice %129 {offsets = [2, 0], sizes = [1, 128], strides = [1, 1]} : vector<4x128xf32> to vector<1x128xf32>
    %133 = vector.extract_strided_slice %129 {offsets = [3, 0], sizes = [1, 128], strides = [1, 1]} : vector<4x128xf32> to vector<1x128xf32>
    %cst_35 = arith.constant 0.000000e+00 : f32
    %134 = vector.broadcast %cst_35 : f32 to vector<1x128xf32>
    %135 = arith.cmpf oeq, %1, %134 : vector<1x128xf32>
    %cst_36 = arith.constant 1.000000e+00 : f32
    %136 = vector.broadcast %cst_36 : f32 to vector<1x128xf32>
    %137 = arith.cmpf oeq, %130, %136 : vector<1x128xf32>
    %138 = arith.andi %135, %137 : vector<1x128xi1>
    %cst_37 = arith.constant dense<true> : vector<1x128xi1>
    %139 = arith.xori %138, %cst_37 : vector<1x128xi1>
    %140 = arith.andi %120, %139 : vector<1x128xi1>
    %cst_38 = arith.constant 1.000000e+00 : f32
    %141 = vector.broadcast %cst_38 : f32 to vector<1x128xf32>
    %142 = arith.cmpf oeq, %1, %141 : vector<1x128xf32>
    %cst_39 = arith.constant 0.000000e+00 : f32
    %143 = vector.broadcast %cst_39 : f32 to vector<1x128xf32>
    %144 = arith.cmpf oeq, %130, %143 : vector<1x128xf32>
    %145 = arith.andi %142, %144 : vector<1x128xi1>
    %cst_40 = arith.constant dense<true> : vector<1x128xi1>
    %146 = arith.xori %145, %cst_40 : vector<1x128xi1>
    %147 = arith.andi %140, %146 : vector<1x128xi1>
    %148 = arith.subf %131, %2 : vector<1x128xf32>
    %149 = arith.subf %132, %3 : vector<1x128xf32>
    %150 = arith.subf %133, %4 : vector<1x128xf32>
    %151 = arith.mulf %148, %148 : vector<1x128xf32>
    %cst_41 = arith.constant 1.000000e+00 : f32
    %152 = vector.broadcast %cst_41 : f32 to vector<1x128xf32>
    %153 = arith.addf %152, %151 : vector<1x128xf32>
    %154 = arith.mulf %149, %149 : vector<1x128xf32>
    %155 = arith.addf %153, %154 : vector<1x128xf32>
    %156 = arith.mulf %150, %150 : vector<1x128xf32>
    %157 = arith.addf %155, %156 : vector<1x128xf32>
    %158 = tpu.reciprocal %157 {approx = true} : vector<1x128xf32> -> vector<1x128xf32>
    %159 = arith.mulf %157, %158 : vector<1x128xf32>
    %cst_42 = arith.constant 2.000000e+00 : f32
    %160 = vector.broadcast %cst_42 : f32 to vector<1x128xf32>
    %161 = arith.subf %160, %159 : vector<1x128xf32>
    %162 = arith.mulf %158, %161 : vector<1x128xf32>
    %163 = arith.extui %147 : vector<1x128xi1> to vector<1x128xi32>
    %164 = arith.sitofp %163 : vector<1x128xi32> to vector<1x128xf32>
    %165 = arith.mulf %164, %162 : vector<1x128xf32>
    %cst_43 = arith.constant 0.000000e+00 : f32
    %166 = vector.broadcast %cst_43 : f32 to vector<1x128xf32>
    %167 = arith.maximumf %1, %166 : vector<1x128xf32>
    %cst_44 = arith.constant 3.000000e+00 : f32
    %168 = vector.broadcast %cst_44 : f32 to vector<1x128xf32>
    %169 = arith.mulf %167, %168 : vector<1x128xf32>
    %cst_45 = arith.constant 0.000000e+00 : f32
    %170 = vector.broadcast %cst_45 : f32 to vector<1x128xf32>
    %171 = arith.maximumf %130, %170 : vector<1x128xf32>
    %172 = arith.addf %169, %171 : vector<1x128xf32>
    %cst_46 = arith.constant 0.000000e+00 : f32
    %173 = vector.broadcast %cst_46 : f32 to vector<1x128xf32>
    %cst_47 = arith.constant 0.000000e+00 : f32
    %174 = vector.broadcast %cst_47 : f32 to vector<1x128xf32>
    %175 = arith.cmpf oeq, %172, %174 : vector<1x128xf32>
    %c0_48 = arith.constant 0 : index
    %176 = memref.load %arg3[%c0_48] : memref<12xf32, #tpu.memory_space<smem>>
    %177 = vector.broadcast %176 : f32 to vector<1x128xf32>
    %178 = arith.select %175, %177, %173 : vector<1x128xi1>, vector<1x128xf32>
    %cst_49 = arith.constant 1.000000e+00 : f32
    %179 = vector.broadcast %cst_49 : f32 to vector<1x128xf32>
    %180 = arith.cmpf oeq, %172, %179 : vector<1x128xf32>
    %c1_50 = arith.constant 1 : index
    %181 = memref.load %arg3[%c1_50] : memref<12xf32, #tpu.memory_space<smem>>
    %182 = vector.broadcast %181 : f32 to vector<1x128xf32>
    %183 = arith.select %180, %182, %178 : vector<1x128xi1>, vector<1x128xf32>
    %cst_51 = arith.constant 2.000000e+00 : f32
    %184 = vector.broadcast %cst_51 : f32 to vector<1x128xf32>
    %185 = arith.cmpf oeq, %172, %184 : vector<1x128xf32>
    %c2_52 = arith.constant 2 : index
    %186 = memref.load %arg3[%c2_52] : memref<12xf32, #tpu.memory_space<smem>>
    %187 = vector.broadcast %186 : f32 to vector<1x128xf32>
    %188 = arith.select %185, %187, %183 : vector<1x128xi1>, vector<1x128xf32>
    %cst_53 = arith.constant 3.000000e+00 : f32
    %189 = vector.broadcast %cst_53 : f32 to vector<1x128xf32>
    %190 = arith.cmpf oeq, %172, %189 : vector<1x128xf32>
    %c3_54 = arith.constant 3 : index
    %191 = memref.load %arg3[%c3_54] : memref<12xf32, #tpu.memory_space<smem>>
    %192 = vector.broadcast %191 : f32 to vector<1x128xf32>
    %193 = arith.select %190, %192, %188 : vector<1x128xi1>, vector<1x128xf32>
    %cst_55 = arith.constant 4.000000e+00 : f32
    %194 = vector.broadcast %cst_55 : f32 to vector<1x128xf32>
    %195 = arith.cmpf oeq, %172, %194 : vector<1x128xf32>
    %c4_56 = arith.constant 4 : index
    %196 = memref.load %arg3[%c4_56] : memref<12xf32, #tpu.memory_space<smem>>
    %197 = vector.broadcast %196 : f32 to vector<1x128xf32>
    %198 = arith.select %195, %197, %193 : vector<1x128xi1>, vector<1x128xf32>
    %cst_57 = arith.constant 5.000000e+00 : f32
    %199 = vector.broadcast %cst_57 : f32 to vector<1x128xf32>
    %200 = arith.cmpf oeq, %172, %199 : vector<1x128xf32>
    %c5_58 = arith.constant 5 : index
    %201 = memref.load %arg3[%c5_58] : memref<12xf32, #tpu.memory_space<smem>>
    %202 = vector.broadcast %201 : f32 to vector<1x128xf32>
    %203 = arith.select %200, %202, %198 : vector<1x128xi1>, vector<1x128xf32>
    %cst_59 = arith.constant 6.000000e+00 : f32
    %204 = vector.broadcast %cst_59 : f32 to vector<1x128xf32>
    %205 = arith.cmpf oeq, %172, %204 : vector<1x128xf32>
    %c6_60 = arith.constant 6 : index
    %206 = memref.load %arg3[%c6_60] : memref<12xf32, #tpu.memory_space<smem>>
    %207 = vector.broadcast %206 : f32 to vector<1x128xf32>
    %208 = arith.select %205, %207, %203 : vector<1x128xi1>, vector<1x128xf32>
    %cst_61 = arith.constant 7.000000e+00 : f32
    %209 = vector.broadcast %cst_61 : f32 to vector<1x128xf32>
    %210 = arith.cmpf oeq, %172, %209 : vector<1x128xf32>
    %c7_62 = arith.constant 7 : index
    %211 = memref.load %arg3[%c7_62] : memref<12xf32, #tpu.memory_space<smem>>
    %212 = vector.broadcast %211 : f32 to vector<1x128xf32>
    %213 = arith.select %210, %212, %208 : vector<1x128xi1>, vector<1x128xf32>
    %cst_63 = arith.constant 8.000000e+00 : f32
    %214 = vector.broadcast %cst_63 : f32 to vector<1x128xf32>
    %215 = arith.cmpf oeq, %172, %214 : vector<1x128xf32>
    %c8_64 = arith.constant 8 : index
    %216 = memref.load %arg3[%c8_64] : memref<12xf32, #tpu.memory_space<smem>>
    %217 = vector.broadcast %216 : f32 to vector<1x128xf32>
    %218 = arith.select %215, %217, %213 : vector<1x128xi1>, vector<1x128xf32>
    %219 = arith.mulf %218, %165 : vector<1x128xf32>
    %220 = arith.addf %117, %219 : vector<1x128xf32>
    %c2_65 = arith.constant 2 : index
    %c0_66 = arith.constant 0 : index
    %221 = vector.load %arg2[%c2_65, %c0_66] : memref<4x128xi32, #tpu.memory_space<vmem>>, vector<1x128xi32>
    %c0_i32_67 = arith.constant 0 : i32
    %222 = vector.broadcast %c0_i32_67 : i32 to vector<1x128xi32>
    %223 = arith.cmpi sge, %221, %222 : vector<1x128xi32>
    %224 = arith.addi %221, %13 : vector<1x128xi32>
    %c-1_i32_68 = arith.constant -1 : i32
    %225 = vector.broadcast %c-1_i32_68 : i32 to vector<1x128xi32>
    %226 = arith.select %223, %224, %225 : vector<1x128xi1>, vector<1x128xi32>
    %227 = tpu.iota {dimensions = array<i32: 0>} : vector<32x128xi32>
    %228 = vector.broadcast %226 : vector<1x128xi32> to vector<32x128xi32>
    %229 = arith.cmpi eq, %227, %228 : vector<32x128xi32>
    %230 = arith.extui %229 : vector<32x128xi1> to vector<32x128xi32>
    %231 = arith.sitofp %230 : vector<32x128xi32> to vector<32x128xf32>
    %cst_69 = arith.constant dense<0.000000e+00> : vector<4x128xf32>
    %232 = tpu.matmul %5, %231, %cst_69 {dimension_numbers = #tpu.dot_dimension_numbers<[1], [0], [0], [1], [0, 0, 1, 1], [], []>, precision = #tpu.contract_precision<fp32>} : vector<4x32xf32>, vector<32x128xf32>, vector<4x128xf32> -> vector<4x128xf32>
    %233 = vector.extract_strided_slice %232 {offsets = [0, 0], sizes = [1, 128], strides = [1, 1]} : vector<4x128xf32> to vector<1x128xf32>
    %234 = vector.extract_strided_slice %232 {offsets = [1, 0], sizes = [1, 128], strides = [1, 1]} : vector<4x128xf32> to vector<1x128xf32>
    %235 = vector.extract_strided_slice %232 {offsets = [2, 0], sizes = [1, 128], strides = [1, 1]} : vector<4x128xf32> to vector<1x128xf32>
    %236 = vector.extract_strided_slice %232 {offsets = [3, 0], sizes = [1, 128], strides = [1, 1]} : vector<4x128xf32> to vector<1x128xf32>
    %cst_70 = arith.constant 0.000000e+00 : f32
    %237 = vector.broadcast %cst_70 : f32 to vector<1x128xf32>
    %238 = arith.cmpf oeq, %1, %237 : vector<1x128xf32>
    %cst_71 = arith.constant 1.000000e+00 : f32
    %239 = vector.broadcast %cst_71 : f32 to vector<1x128xf32>
    %240 = arith.cmpf oeq, %233, %239 : vector<1x128xf32>
    %241 = arith.andi %238, %240 : vector<1x128xi1>
    %cst_72 = arith.constant dense<true> : vector<1x128xi1>
    %242 = arith.xori %241, %cst_72 : vector<1x128xi1>
    %243 = arith.andi %223, %242 : vector<1x128xi1>
    %cst_73 = arith.constant 1.000000e+00 : f32
    %244 = vector.broadcast %cst_73 : f32 to vector<1x128xf32>
    %245 = arith.cmpf oeq, %1, %244 : vector<1x128xf32>
    %cst_74 = arith.constant 0.000000e+00 : f32
    %246 = vector.broadcast %cst_74 : f32 to vector<1x128xf32>
    %247 = arith.cmpf oeq, %233, %246 : vector<1x128xf32>
    %248 = arith.andi %245, %247 : vector<1x128xi1>
    %cst_75 = arith.constant dense<true> : vector<1x128xi1>
    %249 = arith.xori %248, %cst_75 : vector<1x128xi1>
    %250 = arith.andi %243, %249 : vector<1x128xi1>
    %251 = arith.subf %234, %2 : vector<1x128xf32>
    %252 = arith.subf %235, %3 : vector<1x128xf32>
    %253 = arith.subf %236, %4 : vector<1x128xf32>
    %254 = arith.mulf %251, %251 : vector<1x128xf32>
    %cst_76 = arith.constant 1.000000e+00 : f32
    %255 = vector.broadcast %cst_76 : f32 to vector<1x128xf32>
    %256 = arith.addf %255, %254 : vector<1x128xf32>
    %257 = arith.mulf %252, %252 : vector<1x128xf32>
    %258 = arith.addf %256, %257 : vector<1x128xf32>
    %259 = arith.mulf %253, %253 : vector<1x128xf32>
    %260 = arith.addf %258, %259 : vector<1x128xf32>
    %261 = tpu.reciprocal %260 {approx = true} : vector<1x128xf32> -> vector<1x128xf32>
    %262 = arith.mulf %260, %261 : vector<1x128xf32>
    %cst_77 = arith.constant 2.000000e+00 : f32
    %263 = vector.broadcast %cst_77 : f32 to vector<1x128xf32>
    %264 = arith.subf %263, %262 : vector<1x128xf32>
    %265 = arith.mulf %261, %264 : vector<1x128xf32>
    %266 = arith.extui %250 : vector<1x128xi1> to vector<1x128xi32>
    %267 = arith.sitofp %266 : vector<1x128xi32> to vector<1x128xf32>
    %268 = arith.mulf %267, %265 : vector<1x128xf32>
    %cst_78 = arith.constant 0.000000e+00 : f32
    %269 = vector.broadcast %cst_78 : f32 to vector<1x128xf32>
    %270 = arith.maximumf %1, %269 : vector<1x128xf32>
    %cst_79 = arith.constant 3.000000e+00 : f32
    %271 = vector.broadcast %cst_79 : f32 to vector<1x128xf32>
    %272 = arith.mulf %270, %271 : vector<1x128xf32>
    %cst_80 = arith.constant 0.000000e+00 : f32
    %273 = vector.broadcast %cst_80 : f32 to vector<1x128xf32>
    %274 = arith.maximumf %233, %273 : vector<1x128xf32>
    %275 = arith.addf %272, %274 : vector<1x128xf32>
    %cst_81 = arith.constant 0.000000e+00 : f32
    %276 = vector.broadcast %cst_81 : f32 to vector<1x128xf32>
    %cst_82 = arith.constant 0.000000e+00 : f32
    %277 = vector.broadcast %cst_82 : f32 to vector<1x128xf32>
    %278 = arith.cmpf oeq, %275, %277 : vector<1x128xf32>
    %c0_83 = arith.constant 0 : index
    %279 = memref.load %arg3[%c0_83] : memref<12xf32, #tpu.memory_space<smem>>
    %280 = vector.broadcast %279 : f32 to vector<1x128xf32>
    %281 = arith.select %278, %280, %276 : vector<1x128xi1>, vector<1x128xf32>
    %cst_84 = arith.constant 1.000000e+00 : f32
    %282 = vector.broadcast %cst_84 : f32 to vector<1x128xf32>
    %283 = arith.cmpf oeq, %275, %282 : vector<1x128xf32>
    %c1_85 = arith.constant 1 : index
    %284 = memref.load %arg3[%c1_85] : memref<12xf32, #tpu.memory_space<smem>>
    %285 = vector.broadcast %284 : f32 to vector<1x128xf32>
    %286 = arith.select %283, %285, %281 : vector<1x128xi1>, vector<1x128xf32>
    %cst_86 = arith.constant 2.000000e+00 : f32
    %287 = vector.broadcast %cst_86 : f32 to vector<1x128xf32>
    %288 = arith.cmpf oeq, %275, %287 : vector<1x128xf32>
    %c2_87 = arith.constant 2 : index
    %289 = memref.load %arg3[%c2_87] : memref<12xf32, #tpu.memory_space<smem>>
    %290 = vector.broadcast %289 : f32 to vector<1x128xf32>
    %291 = arith.select %288, %290, %286 : vector<1x128xi1>, vector<1x128xf32>
    %cst_88 = arith.constant 3.000000e+00 : f32
    %292 = vector.broadcast %cst_88 : f32 to vector<1x128xf32>
    %293 = arith.cmpf oeq, %275, %292 : vector<1x128xf32>
    %c3_89 = arith.constant 3 : index
    %294 = memref.load %arg3[%c3_89] : memref<12xf32, #tpu.memory_space<smem>>
    %295 = vector.broadcast %294 : f32 to vector<1x128xf32>
    %296 = arith.select %293, %295, %291 : vector<1x128xi1>, vector<1x128xf32>
    %cst_90 = arith.constant 4.000000e+00 : f32
    %297 = vector.broadcast %cst_90 : f32 to vector<1x128xf32>
    %298 = arith.cmpf oeq, %275, %297 : vector<1x128xf32>
    %c4_91 = arith.constant 4 : index
    %299 = memref.load %arg3[%c4_91] : memref<12xf32, #tpu.memory_space<smem>>
    %300 = vector.broadcast %299 : f32 to vector<1x128xf32>
    %301 = arith.select %298, %300, %296 : vector<1x128xi1>, vector<1x128xf32>
    %cst_92 = arith.constant 5.000000e+00 : f32
    %302 = vector.broadcast %cst_92 : f32 to vector<1x128xf32>
    %303 = arith.cmpf oeq, %275, %302 : vector<1x128xf32>
    %c5_93 = arith.constant 5 : index
    %304 = memref.load %arg3[%c5_93] : memref<12xf32, #tpu.memory_space<smem>>
    %305 = vector.broadcast %304 : f32 to vector<1x128xf32>
    %306 = arith.select %303, %305, %301 : vector<1x128xi1>, vector<1x128xf32>
    %cst_94 = arith.constant 6.000000e+00 : f32
    %307 = vector.broadcast %cst_94 : f32 to vector<1x128xf32>
    %308 = arith.cmpf oeq, %275, %307 : vector<1x128xf32>
    %c6_95 = arith.constant 6 : index
    %309 = memref.load %arg3[%c6_95] : memref<12xf32, #tpu.memory_space<smem>>
    %310 = vector.broadcast %309 : f32 to vector<1x128xf32>
    %311 = arith.select %308, %310, %306 : vector<1x128xi1>, vector<1x128xf32>
    %cst_96 = arith.constant 7.000000e+00 : f32
    %312 = vector.broadcast %cst_96 : f32 to vector<1x128xf32>
    %313 = arith.cmpf oeq, %275, %312 : vector<1x128xf32>
    %c7_97 = arith.constant 7 : index
    %314 = memref.load %arg3[%c7_97] : memref<12xf32, #tpu.memory_space<smem>>
    %315 = vector.broadcast %314 : f32 to vector<1x128xf32>
    %316 = arith.select %313, %315, %311 : vector<1x128xi1>, vector<1x128xf32>
    %cst_98 = arith.constant 8.000000e+00 : f32
    %317 = vector.broadcast %cst_98 : f32 to vector<1x128xf32>
    %318 = arith.cmpf oeq, %275, %317 : vector<1x128xf32>
    %c8_99 = arith.constant 8 : index
    %319 = memref.load %arg3[%c8_99] : memref<12xf32, #tpu.memory_space<smem>>
    %320 = vector.broadcast %319 : f32 to vector<1x128xf32>
    %321 = arith.select %318, %320, %316 : vector<1x128xi1>, vector<1x128xf32>
    %322 = arith.mulf %321, %268 : vector<1x128xf32>
    %323 = arith.addf %220, %322 : vector<1x128xf32>
    %c3_100 = arith.constant 3 : index
    %c0_101 = arith.constant 0 : index
    %324 = vector.load %arg2[%c3_100, %c0_101] : memref<4x128xi32, #tpu.memory_space<vmem>>, vector<1x128xi32>
    %c0_i32_102 = arith.constant 0 : i32
    %325 = vector.broadcast %c0_i32_102 : i32 to vector<1x128xi32>
    %326 = arith.cmpi sge, %324, %325 : vector<1x128xi32>
    %327 = arith.addi %324, %13 : vector<1x128xi32>
    %c-1_i32_103 = arith.constant -1 : i32
    %328 = vector.broadcast %c-1_i32_103 : i32 to vector<1x128xi32>
    %329 = arith.select %326, %327, %328 : vector<1x128xi1>, vector<1x128xi32>
    %330 = tpu.iota {dimensions = array<i32: 0>} : vector<32x128xi32>
    %331 = vector.broadcast %329 : vector<1x128xi32> to vector<32x128xi32>
    %332 = arith.cmpi eq, %330, %331 : vector<32x128xi32>
    %333 = arith.extui %332 : vector<32x128xi1> to vector<32x128xi32>
    %334 = arith.sitofp %333 : vector<32x128xi32> to vector<32x128xf32>
    %cst_104 = arith.constant dense<0.000000e+00> : vector<4x128xf32>
    %335 = tpu.matmul %5, %334, %cst_104 {dimension_numbers = #tpu.dot_dimension_numbers<[1], [0], [0], [1], [0, 0, 1, 1], [], []>, precision = #tpu.contract_precision<fp32>} : vector<4x32xf32>, vector<32x128xf32>, vector<4x128xf32> -> vector<4x128xf32>
    %336 = vector.extract_strided_slice %335 {offsets = [0, 0], sizes = [1, 128], strides = [1, 1]} : vector<4x128xf32> to vector<1x128xf32>
    %337 = vector.extract_strided_slice %335 {offsets = [1, 0], sizes = [1, 128], strides = [1, 1]} : vector<4x128xf32> to vector<1x128xf32>
    %338 = vector.extract_strided_slice %335 {offsets = [2, 0], sizes = [1, 128], strides = [1, 1]} : vector<4x128xf32> to vector<1x128xf32>
    %339 = vector.extract_strided_slice %335 {offsets = [3, 0], sizes = [1, 128], strides = [1, 1]} : vector<4x128xf32> to vector<1x128xf32>
    %cst_105 = arith.constant 0.000000e+00 : f32
    %340 = vector.broadcast %cst_105 : f32 to vector<1x128xf32>
    %341 = arith.cmpf oeq, %1, %340 : vector<1x128xf32>
    %cst_106 = arith.constant 1.000000e+00 : f32
    %342 = vector.broadcast %cst_106 : f32 to vector<1x128xf32>
    %343 = arith.cmpf oeq, %336, %342 : vector<1x128xf32>
    %344 = arith.andi %341, %343 : vector<1x128xi1>
    %cst_107 = arith.constant dense<true> : vector<1x128xi1>
    %345 = arith.xori %344, %cst_107 : vector<1x128xi1>
    %346 = arith.andi %326, %345 : vector<1x128xi1>
    %cst_108 = arith.constant 1.000000e+00 : f32
    %347 = vector.broadcast %cst_108 : f32 to vector<1x128xf32>
    %348 = arith.cmpf oeq, %1, %347 : vector<1x128xf32>
    %cst_109 = arith.constant 0.000000e+00 : f32
    %349 = vector.broadcast %cst_109 : f32 to vector<1x128xf32>
    %350 = arith.cmpf oeq, %336, %349 : vector<1x128xf32>
    %351 = arith.andi %348, %350 : vector<1x128xi1>
    %cst_110 = arith.constant dense<true> : vector<1x128xi1>
    %352 = arith.xori %351, %cst_110 : vector<1x128xi1>
    %353 = arith.andi %346, %352 : vector<1x128xi1>
    %354 = arith.subf %337, %2 : vector<1x128xf32>
    %355 = arith.subf %338, %3 : vector<1x128xf32>
    %356 = arith.subf %339, %4 : vector<1x128xf32>
    %357 = arith.mulf %354, %354 : vector<1x128xf32>
    %cst_111 = arith.constant 1.000000e+00 : f32
    %358 = vector.broadcast %cst_111 : f32 to vector<1x128xf32>
    %359 = arith.addf %358, %357 : vector<1x128xf32>
    %360 = arith.mulf %355, %355 : vector<1x128xf32>
    %361 = arith.addf %359, %360 : vector<1x128xf32>
    %362 = arith.mulf %356, %356 : vector<1x128xf32>
    %363 = arith.addf %361, %362 : vector<1x128xf32>
    %364 = tpu.reciprocal %363 {approx = true} : vector<1x128xf32> -> vector<1x128xf32>
    %365 = arith.mulf %363, %364 : vector<1x128xf32>
    %cst_112 = arith.constant 2.000000e+00 : f32
    %366 = vector.broadcast %cst_112 : f32 to vector<1x128xf32>
    %367 = arith.subf %366, %365 : vector<1x128xf32>
    %368 = arith.mulf %364, %367 : vector<1x128xf32>
    %369 = arith.extui %353 : vector<1x128xi1> to vector<1x128xi32>
    %370 = arith.sitofp %369 : vector<1x128xi32> to vector<1x128xf32>
    %371 = arith.mulf %370, %368 : vector<1x128xf32>
    %cst_113 = arith.constant 0.000000e+00 : f32
    %372 = vector.broadcast %cst_113 : f32 to vector<1x128xf32>
    %373 = arith.maximumf %1, %372 : vector<1x128xf32>
    %cst_114 = arith.constant 3.000000e+00 : f32
    %374 = vector.broadcast %cst_114 : f32 to vector<1x128xf32>
    %375 = arith.mulf %373, %374 : vector<1x128xf32>
    %cst_115 = arith.constant 0.000000e+00 : f32
    %376 = vector.broadcast %cst_115 : f32 to vector<1x128xf32>
    %377 = arith.maximumf %336, %376 : vector<1x128xf32>
    %378 = arith.addf %375, %377 : vector<1x128xf32>
    %cst_116 = arith.constant 0.000000e+00 : f32
    %379 = vector.broadcast %cst_116 : f32 to vector<1x128xf32>
    %cst_117 = arith.constant 0.000000e+00 : f32
    %380 = vector.broadcast %cst_117 : f32 to vector<1x128xf32>
    %381 = arith.cmpf oeq, %378, %380 : vector<1x128xf32>
    %c0_118 = arith.constant 0 : index
    %382 = memref.load %arg3[%c0_118] : memref<12xf32, #tpu.memory_space<smem>>
    %383 = vector.broadcast %382 : f32 to vector<1x128xf32>
    %384 = arith.select %381, %383, %379 : vector<1x128xi1>, vector<1x128xf32>
    %cst_119 = arith.constant 1.000000e+00 : f32
    %385 = vector.broadcast %cst_119 : f32 to vector<1x128xf32>
    %386 = arith.cmpf oeq, %378, %385 : vector<1x128xf32>
    %c1_120 = arith.constant 1 : index
    %387 = memref.load %arg3[%c1_120] : memref<12xf32, #tpu.memory_space<smem>>
    %388 = vector.broadcast %387 : f32 to vector<1x128xf32>
    %389 = arith.select %386, %388, %384 : vector<1x128xi1>, vector<1x128xf32>
    %cst_121 = arith.constant 2.000000e+00 : f32
    %390 = vector.broadcast %cst_121 : f32 to vector<1x128xf32>
    %391 = arith.cmpf oeq, %378, %390 : vector<1x128xf32>
    %c2_122 = arith.constant 2 : index
    %392 = memref.load %arg3[%c2_122] : memref<12xf32, #tpu.memory_space<smem>>
    %393 = vector.broadcast %392 : f32 to vector<1x128xf32>
    %394 = arith.select %391, %393, %389 : vector<1x128xi1>, vector<1x128xf32>
    %cst_123 = arith.constant 3.000000e+00 : f32
    %395 = vector.broadcast %cst_123 : f32 to vector<1x128xf32>
    %396 = arith.cmpf oeq, %378, %395 : vector<1x128xf32>
    %c3_124 = arith.constant 3 : index
    %397 = memref.load %arg3[%c3_124] : memref<12xf32, #tpu.memory_space<smem>>
    %398 = vector.broadcast %397 : f32 to vector<1x128xf32>
    %399 = arith.select %396, %398, %394 : vector<1x128xi1>, vector<1x128xf32>
    %cst_125 = arith.constant 4.000000e+00 : f32
    %400 = vector.broadcast %cst_125 : f32 to vector<1x128xf32>
    %401 = arith.cmpf oeq, %378, %400 : vector<1x128xf32>
    %c4_126 = arith.constant 4 : index
    %402 = memref.load %arg3[%c4_126] : memref<12xf32, #tpu.memory_space<smem>>
    %403 = vector.broadcast %402 : f32 to vector<1x128xf32>
    %404 = arith.select %401, %403, %399 : vector<1x128xi1>, vector<1x128xf32>
    %cst_127 = arith.constant 5.000000e+00 : f32
    %405 = vector.broadcast %cst_127 : f32 to vector<1x128xf32>
    %406 = arith.cmpf oeq, %378, %405 : vector<1x128xf32>
    %c5_128 = arith.constant 5 : index
    %407 = memref.load %arg3[%c5_128] : memref<12xf32, #tpu.memory_space<smem>>
    %408 = vector.broadcast %407 : f32 to vector<1x128xf32>
    %409 = arith.select %406, %408, %404 : vector<1x128xi1>, vector<1x128xf32>
    %cst_129 = arith.constant 6.000000e+00 : f32
    %410 = vector.broadcast %cst_129 : f32 to vector<1x128xf32>
    %411 = arith.cmpf oeq, %378, %410 : vector<1x128xf32>
    %c6_130 = arith.constant 6 : index
    %412 = memref.load %arg3[%c6_130] : memref<12xf32, #tpu.memory_space<smem>>
    %413 = vector.broadcast %412 : f32 to vector<1x128xf32>
    %414 = arith.select %411, %413, %409 : vector<1x128xi1>, vector<1x128xf32>
    %cst_131 = arith.constant 7.000000e+00 : f32
    %415 = vector.broadcast %cst_131 : f32 to vector<1x128xf32>
    %416 = arith.cmpf oeq, %378, %415 : vector<1x128xf32>
    %c7_132 = arith.constant 7 : index
    %417 = memref.load %arg3[%c7_132] : memref<12xf32, #tpu.memory_space<smem>>
    %418 = vector.broadcast %417 : f32 to vector<1x128xf32>
    %419 = arith.select %416, %418, %414 : vector<1x128xi1>, vector<1x128xf32>
    %cst_133 = arith.constant 8.000000e+00 : f32
    %420 = vector.broadcast %cst_133 : f32 to vector<1x128xf32>
    %421 = arith.cmpf oeq, %378, %420 : vector<1x128xf32>
    %c8_134 = arith.constant 8 : index
    %422 = memref.load %arg3[%c8_134] : memref<12xf32, #tpu.memory_space<smem>>
    %423 = vector.broadcast %422 : f32 to vector<1x128xf32>
    %424 = arith.select %421, %423, %419 : vector<1x128xi1>, vector<1x128xf32>
    %425 = arith.mulf %424, %371 : vector<1x128xf32>
    %426 = arith.addf %323, %425 : vector<1x128xf32>
    %cst_135 = arith.constant 0.000000e+00 : f32
    %427 = vector.broadcast %cst_135 : f32 to vector<1x128xf32>
    %cst_136 = arith.constant 0.000000e+00 : f32
    %428 = vector.broadcast %cst_136 : f32 to vector<1x128xf32>
    %429 = arith.cmpf oeq, %1, %428 : vector<1x128xf32>
    %c9 = arith.constant 9 : index
    %430 = memref.load %arg3[%c9] : memref<12xf32, #tpu.memory_space<smem>>
    %431 = vector.broadcast %430 : f32 to vector<1x128xf32>
    %432 = arith.select %429, %431, %427 : vector<1x128xi1>, vector<1x128xf32>
    %cst_137 = arith.constant 1.000000e+00 : f32
    %433 = vector.broadcast %cst_137 : f32 to vector<1x128xf32>
    %434 = arith.cmpf oeq, %1, %433 : vector<1x128xf32>
    %c10 = arith.constant 10 : index
    %435 = memref.load %arg3[%c10] : memref<12xf32, #tpu.memory_space<smem>>
    %436 = vector.broadcast %435 : f32 to vector<1x128xf32>
    %437 = arith.select %434, %436, %432 : vector<1x128xi1>, vector<1x128xf32>
    %cst_138 = arith.constant 2.000000e+00 : f32
    %438 = vector.broadcast %cst_138 : f32 to vector<1x128xf32>
    %439 = arith.cmpf oeq, %1, %438 : vector<1x128xf32>
    %c11 = arith.constant 11 : index
    %440 = memref.load %arg3[%c11] : memref<12xf32, #tpu.memory_space<smem>>
    %441 = vector.broadcast %440 : f32 to vector<1x128xf32>
    %442 = arith.select %439, %441, %437 : vector<1x128xi1>, vector<1x128xf32>
    %443 = arith.addf %426, %442 : vector<1x128xf32>
    %cst_139 = arith.constant 0.000000e+00 : f32
    %444 = vector.broadcast %cst_139 : f32 to vector<1x128xf32>
    %445 = arith.cmpf oge, %1, %444 : vector<1x128xf32>
    %cst_140 = arith.constant 2.000000e+00 : f32
    %446 = vector.broadcast %cst_140 : f32 to vector<1x128xf32>
    %447 = arith.cmpf one, %1, %446 : vector<1x128xf32>
    %448 = arith.andi %445, %447 : vector<1x128xi1>
    %449 = arith.extui %448 : vector<1x128xi1> to vector<1x128xi32>
    %450 = arith.sitofp %449 : vector<1x128xi32> to vector<1x128xf32>
    %451 = arith.mulf %443, %450 : vector<1x128xf32>
    %452 = tpu.concatenate %451, %450 in 0 : vector<1x128xf32>, vector<1x128xf32> -> vector<2x128xf32>
    %c0_141 = arith.constant 0 : index
    %c0_142 = arith.constant 0 : index
    %453 = vector.load %arg4[%c0_141, %c0_142] : memref<2x128xf32, #tpu.memory_space<vmem>>, vector<2x128xf32>
    tpu.vector_store %arg4[%c0_141, %c0_142], %452 {strides = array<i32>} : memref<2x128xf32, #tpu.memory_space<vmem>>, vector<2x128xf32>,
    return
  }
}

</mosaic_0001>

<llo_original>
// kernel: tpu_custom_call.1
$region0: #{tpu_custom_call.1}
  #allocation0 [shape = 'u32[]', space=smem, size = 0x4, offset = 0x4, fixed_abs, tag = 'smem constant byte address 0x4 - core index']
  #allocation1 [shape = 'u32[144,128]{1,0:T(1,128)}', space=vmem, size = 0x12000, scoped, tag = 'internal scratch']
  %s0 = inlined_call_operand.hbm [shape: f32[4,128], index: 0, kind: input, shape index: {}]
  %s1 = inlined_call_operand.hbm [shape: f32[4,32], index: 1, kind: input, shape index: {}]
  %s2 = inlined_call_operand.vmem [shape: s32[4,128], index: 2, kind: input, shape index: {}]
  %s3 = inlined_call_operand.vmem [shape: f32[12], index: 3, kind: input, shape index: {}]
  %s4 = inlined_call_operand.hbm [shape: f32[2,128], index: 4, kind: output, shape index: {}]
  %s5 = sld [smem:[#allocation0]]
  $region38: #{tpu_custom_call.1} parent=0
    _
  %s7 = ssub.s32 1, %s5
  %s8 = scalar_select 0, %s7, %s5
  $region1: #{tpu_custom_call.1} parent=0
    #allocation2 [shape = 'u8[2048]{0}', space=vmem, size = 0x800, scoped, tag = 'input window, operand 0, single buffered']
    #allocation3 [shape = 's32[1]{0}', space=sflag, size = 0x4, scoped, tag = 'scoped memory for tpu_custom_call.1']
    #allocation4 [shape = 's32[1]{0}', space=sflag, size = 0x4, scoped, tag = 'scoped memory for tpu_custom_call.1']
    #allocation5 [shape = 's32[1]{0}', space=sflag, size = 0x4, scoped, tag = 'scoped memory for tpu_custom_call.1']
    #allocation6 [shape = 'u8[2048]{0}', space=vmem, size = 0x800, scoped, tag = 'input window, operand 1, single buffered']
    #allocation7 [shape = 's32[1]{0}', space=sflag, size = 0x4, scoped, tag = 'scoped memory for tpu_custom_call.1']
    #allocation8 [shape = 'u8[512]{0}', space=smem, size = 0x200, scoped, tag = 'input window, operand 3, single buffered']
    #allocation9 [shape = 'u8[1024]{0}', space=vmem, size = 0x400, scoped, tag = 'output window, operand 0, single buffered']
    %9 = vsyncpa [#allocation3], 0
    %10 = vsyncpa [#allocation7], 0
    %11 = vsyncpa [#allocation5], 0
    %12 = vsyncpa [#allocation4], 0
    // Predicated region
    $region2: #{tpu_custom_call.1} parent=1 // pred_check
      _
    $region3: #{tpu_custom_call.1} parent=1 // pred_check_branch
      %14 = sbr.rel (0) target = $region5
    $region4: #{tpu_custom_call.1} parent=1 // pred_region
      %s16 = ssub.s32 64, 64
      %17 = vsyncadd [#allocation3], %s16
      %s19 = sshll.u32 [#allocation2], 4
      %s20 = int_to_ptr.vmem [resolvable:$true] %s19
      %22 = dma.hbm_to_vmem [thread:$0]  %s0, 64, %s20, [#allocation3]
    $region5: #{tpu_custom_call.1} parent=1 // pred_fallthru
      _
    // Predicated region
    $region6: #{tpu_custom_call.1} parent=1 // pred_check
      _
    $region7: #{tpu_custom_call.1} parent=1 // pred_check_branch
      %24 = sbr.rel (0) target = $region9
    $region8: #{tpu_custom_call.1} parent=1 // pred_region
      %s26 = ssub.s32 64, 64
      %27 = vsyncadd [#allocation7], %s26
      %s29 = sshll.u32 [#allocation6], 4
      %s30 = int_to_ptr.vmem [resolvable:$true] %s29
      %32 = dma.hbm_to_vmem [thread:$0]  %s1, 64, %s30, [#allocation7]
    $region9: #{tpu_custom_call.1} parent=1 // pred_fallthru
      _
    // Predicated region
    $region10: #{tpu_custom_call.1} parent=1 // pred_check
      _
    $region11: #{tpu_custom_call.1} parent=1 // pred_check_branch
      %34 = sbr.rel (0) target = $region13
    $region12: #{tpu_custom_call.1} parent=1 // pred_region
      _
    $region13: #{tpu_custom_call.1} parent=1 // pred_fallthru
      _
    // Predicated region
    $region14: #{tpu_custom_call.1} parent=1 // pred_check
      _
    $region15: #{tpu_custom_call.1} parent=1 // pred_check_branch
      %36 = sbr.rel (0) target = $region17
    $region16: #{tpu_custom_call.1} parent=1 // pred_region
      %s38 = ssub.s32 16, 16
      %39 = vsyncadd [#allocation5], %s38
      %s41 = sshll.u32 %s3, 4
      %s42 = int_to_ptr.vmem [resolvable:$true] %s41
      %44 = dma.vmem_to_smem %s42, 16, [#allocation8], [#allocation5]
    $region17: #{tpu_custom_call.1} parent=1 // pred_fallthru
      _
    // Predicated region
    $region18: #{tpu_custom_call.1} parent=1 // pred_check
      _
    $region19: #{tpu_custom_call.1} parent=1 // pred_check_branch
      %46 = sbr.rel (0) target = $region21
    $region20: #{tpu_custom_call.1} parent=1 // pred_region
      %47 = dma.done [#allocation3], 64
    $region21: #{tpu_custom_call.1} parent=1 // pred_fallthru
      _
    // Predicated region
    $region22: #{tpu_custom_call.1} parent=1 // pred_check
      _
    $region23: #{tpu_custom_call.1} parent=1 // pred_check_branch
      %49 = sbr.rel (0) target = $region25
    $region24: #{tpu_custom_call.1} parent=1 // pred_region
      %50 = dma.done [#allocation7], 64
    $region25: #{tpu_custom_call.1} parent=1 // pred_fallthru
      _
    // Predicated region
    $region26: #{tpu_custom_call.1} parent=1 // pred_check
      _
    $region27: #{tpu_custom_call.1} parent=1 // pred_check_branch
      %52 = sbr.rel (0) target = $region29
    $region28: #{tpu_custom_call.1} parent=1 // pred_region
      %53 = dma.done [#allocation5], 16
    $region29: #{tpu_custom_call.1} parent=1 // pred_fallthru
      _
    %54 = sfence
    %v55 = vld [vmem:[#allocation2] sm:$0xf]
    %v56 = vld [vmem:[#allocation6] sm:$0xf]
    %v57 = vlaneseq
    %v58 = vand.u32 %v57, 127
    %vm59 = vcmp.ge.s32.totalorder %v58, 8
    %v60 = vsel %vm59, 16, 0
    %v61 = vld [vmem:[%s2] sm:$0x1]
    %vm62 = vcmp.ge.s32.totalorder %v61, 0
    %v63 = vadd.s32 %v61, %v60
    %v64 = vsel %vm62, %v63, 4294967295
    %v65 = vlaneseq
    %v66 = vshrl.u32 %v65, 7
    %v67 = vadd.s32 %v66, 8
    %v68 = vadd.s32 %v66, 16
    %v69 = vadd.s32 %v66, 24
    %v70 = vlaneseq
    %v71 = vshrl.u32 %v70, 7
    %v72 = vsub.s32 0, %v71
    %v73 = vrot.slane %v64, %v72
    %vm74 = vcmp.eq.s32.totalorder %v66, %v73
    %vm75 = vcmp.eq.s32.totalorder %v67, %v73
    %vm76 = vcmp.eq.s32.totalorder %v68, %v73
    %vm77 = vcmp.eq.s32.totalorder %v69, %v73
    %v78 = vsel %vm74, 1, 0
    %v79 = vsel %vm75, 1, 0
    %v80 = vsel %vm76, 1, 0
    %v81 = vsel %vm77, 1, 0
    %v82 = vcvt.s32.f32 %v78
    %v83 = vcvt.s32.f32 %v79
    %v84 = vcvt.s32.f32 %v80
    %v85 = vcvt.s32.f32 %v81
    %vm86 = vcmask 261120
    %v88 = vsel %vm86, %v56, 0
    %90 = vmatprep.subr.mxu0 0.0
    %v91 = vand.u32 %v82, 4294901760
    %92 = vmatpush1.msra.mxu0 %v91
    %93 = vmatprep.subr.mxu0 0.0
    %v94 = vand.u32 %v83, 4294901760
    %95 = vmatpush1.msra.mxu0 %v94
    %96 = vmatprep.subr.mxu0 0.0
    %v97 = vand.u32 %v84, 4294901760
    %98 = vmatpush1.msra.mxu0 %v97
    %99 = vmatprep.subr.mxu0 0.0
    %v100 = vand.u32 %v85, 4294901760
    %101 = vmatpush1.msra.mxu0 %v100
    %102 = vmatprep.subr.mxu0 0.0
    %103 = vmatpush1.msra.mxu0 0.0
    %104 = vmatprep.subr.mxu0 0.0
    %105 = vmatpush1.msra.mxu0 0.0
    %106 = vmatprep.subr.mxu0 0.0
    %107 = vmatpush1.msra.mxu0 0.0
    %108 = vmatprep.subr.mxu0 0.0
    %109 = vmatpush1.msra.mxu0 0.0
    %110 = vmatprep.subr.mxu0 0.0
    %111 = vmatpush1.msra.mxu0 0.0
    %112 = vmatprep.subr.mxu0 0.0
    %113 = vmatpush1.msra.mxu0 0.0
    %114 = vmatprep.subr.mxu0 0.0
    %115 = vmatpush1.msra.mxu0 0.0
    %116 = vmatprep.subr.mxu0 0.0
    %117 = vmatpush1.msra.mxu0 0.0
    %118 = vmatprep.subr.mxu0 0.0
    %119 = vmatpush1.msra.mxu0 0.0
    %120 = vmatprep.subr.mxu0 0.0
    %121 = vmatpush1.msra.mxu0 0.0
    %122 = vmatprep.subr.mxu0 0.0
    %123 = vmatpush1.msra.mxu0 0.0
    %124 = vmatprep.subr.mxu0 0.0
    %125 = vmatpush1.msra.mxu0 0.0
    %126 = vmatprep.subr.mxu0 0.0
    %127 = vmatpush1.msra.mxu0 0.0
    %128 = vmatprep.subr.mxu0 0.0
    %129 = vmatpush1.msra.mxu0 0.0
    %130 = vmatprep.subr.mxu0 0.0
    %131 = vmatpush1.msra.mxu0 0.0
    %132 = vmatprep.subr.mxu0 0.0
    %133 = vmatpush1.msra.mxu0 0.0
    %134 = vmatprep.subr.mxu0 0.0
    %135 = vmatpush1.msra.mxu0 0.0
    %136 = vmatprep.subr.mxu0 0.0
    %137 = vmatpush1.msra.mxu0 0.0
    %138 = vmatprep.subr.mxu0 0.0
    %139 = vmatpush1.msra.mxu0 0.0
    %140 = vmatprep.subr.mxu0 0.0
    %141 = vmatpush1.msra.mxu0 0.0
    %142 = vmatprep.subr.mxu0 0.0
    %143 = vmatpush1.msra.mxu0 0.0
    %144 = vmatprep.subr.mxu0 0.0
    %145 = vmatpush1.msra.mxu0 0.0
    %146 = vmatprep.subr.mxu0 0.0
    %147 = vmatpush1.msra.mxu0 0.0
    %148 = vmatprep.subr.mxu0 0.0
    %149 = vmatpush1.msra.mxu0 0.0
    %150 = vmatprep.subr.mxu0 0.0
    %151 = vmatpush1.msra.mxu0 0.0
    %152 = vmatprep.subr.mxu0 0.0
    %153 = vmatpush1.msra.mxu0 0.0
    %154 = vmatprep.subr.mxu0 0.0
    %155 = vmatpush1.msra.mxu0 0.0
    %156 = vmatprep.subr.mxu0 0.0
    %157 = vmatpush1.msra.mxu0 0.0
    %158 = vmatprep.mubr.f32.mxu0 0.0
    %v159 = vand.u32 %v88, 4294901760
    %v160 = vsub.f32 %v88, %v159
    %v161 = vand.u32 %v160, 4294901760
    %v162 = vsub.f32 %v160, %v161
    %v163 = vand.u32 %v162, 4294901760
    %164 = vmatmul.mubr.f32.gmra.mrb[0].mxu0 %v163
    %v165 = vpop.f32.mrb[0].mxu0
    %v166 = vadd.f32 0.0, %v165
    %v167 = vpop.f32.mrb[0].mxu0
    %168 = vdwg.mxu0
    %169 = vmatprep.subr.mxu0 0.0
    %v170 = vand.u32 %v82, 4294901760
    %v171 = vsub.f32 %v82, %v170
    %v172 = vand.u32 %v171, 4294901760
    %v173 = vsub.f32 %v171, %v172
    %v174 = vand.u32 %v173, 4294901760
    %175 = vmatpush1.msra.mxu0 %v174
    %176 = vmatprep.subr.mxu0 0.0
    %v177 = vand.u32 %v83, 4294901760
    %v178 = vsub.f32 %v83, %v177
    %v179 = vand.u32 %v178, 4294901760
    %v180 = vsub.f32 %v178, %v179
    %v181 = vand.u32 %v180, 4294901760
    %182 = vmatpush1.msra.mxu0 %v181
    %183 = vmatprep.subr.mxu0 0.0
    %v184 = vand.u32 %v84, 4294901760
    %v185 = vsub.f32 %v84, %v184
    %v186 = vand.u32 %v185, 4294901760
    %v187 = vsub.f32 %v185, %v186
    %v188 = vand.u32 %v187, 4294901760
    %189 = vmatpush1.msra.mxu0 %v188
    %190 = vmatprep.subr.mxu0 0.0
    %v191 = vand.u32 %v85, 4294901760
    %v192 = vsub.f32 %v85, %v191
    %v193 = vand.u32 %v192, 4294901760
    %v194 = vsub.f32 %v192, %v193
    %v195 = vand.u32 %v194, 4294901760
    %196 = vmatpush1.msra.mxu0 %v195
    %197 = vmatprep.subr.mxu0 0.0
    %198 = vmatpush1.msra.mxu0 0.0
    %199 = vmatprep.subr.mxu0 0.0
    %200 = vmatpush1.msra.mxu0 0.0
    %201 = vmatprep.subr.mxu0 0.0
    %202 = vmatpush1.msra.mxu0 0.0
    %203 = vmatprep.subr.mxu0 0.0
    %204 = vmatpush1.msra.mxu0 0.0
    %205 = vmatprep.subr.mxu0 0.0
    %206 = vmatpush1.msra.mxu0 0.0
    %207 = vmatprep.subr.mxu0 0.0
    %208 = vmatpush1.msra.mxu0 0.0
    %209 = vmatprep.subr.mxu0 0.0
    %210 = vmatpush1.msra.mxu0 0.0
    %211 = vmatprep.subr.mxu0 0.0
    %212 = vmatpush1.msra.mxu0 0.0
    %213 = vmatprep.subr.mxu0 0.0
    %214 = vmatpush1.msra.mxu0 0.0
    %215 = vmatprep.subr.mxu0 0.0
    %216 = vmatpush1.msra.mxu0 0.0
    %217 = vmatprep.subr.mxu0 0.0
    %218 = vmatpush1.msra.mxu0 0.0
    %219 = vmatprep.subr.mxu0 0.0
    %220 = vmatpush1.msra.mxu0 0.0
    %221 = vmatprep.subr.mxu0 0.0
    %222 = vmatpush1.msra.mxu0 0.0
    %223 = vmatprep.subr.mxu0 0.0
    %224 = vmatpush1.msra.mxu0 0.0
    %225 = vmatprep.subr.mxu0 0.0
    %226 = vmatpush1.msra.mxu0 0.0
    %227 = vmatprep.subr.mxu0 0.0
    %228 = vmatpush1.msra.mxu0 0.0
    %229 = vmatprep.subr.mxu0 0.0
    %230 = vmatpush1.msra.mxu0 0.0
    %231 = vmatprep.subr.mxu0 0.0
    %232 = vmatpush1.msra.mxu0 0.0
    %233 = vmatprep.subr.mxu0 0.0
    %234 = vmatpush1.msra.mxu0 0.0
    %235 = vmatprep.subr.mxu0 0.0
    %236 = vmatpush1.msra.mxu0 0.0
    %237 = vmatprep.subr.mxu0 0.0
    %238 = vmatpush1.msra.mxu0 0.0
    %239 = vmatprep.subr.mxu0 0.0
    %240 = vmatpush1.msra.mxu0 0.0
    %241 = vmatprep.subr.mxu0 0.0
    %242 = vmatpush1.msra.mxu0 0.0
    %243 = vmatprep.subr.mxu0 0.0
    %244 = vmatpush1.msra.mxu0 0.0
    %245 = vmatprep.subr.mxu0 0.0
    %246 = vmatpush1.msra.mxu0 0.0
    %247 = vmatprep.subr.mxu0 0.0
    %248 = vmatpush1.msra.mxu0 0.0
    %249 = vmatprep.subr.mxu0 0.0
    %250 = vmatpush1.msra.mxu0 0.0
    %251 = vmatprep.subr.mxu0 0.0
    %252 = vmatpush1.msra.mxu0 0.0
    %253 = vmatprep.mubr.f32.mxu0 0.0
    %v254 = vand.u32 %v88, 4294901760
    %255 = vmatmul.mubr.f32.gmra.mrb[0].mxu0 %v254
    %v256 = vpop.f32.mrb[0].mxu0
    %v257 = vadd.f32 %v166, %v256
    %v258 = vpop.f32.mrb[0].mxu0
    %259 = vdwg.mxu0
    %260 = vmatprep.subr.mxu0 0.0
    %v261 = vand.u32 %v82, 4294901760
    %v262 = vsub.f32 %v82, %v261
    %263 = vmatpush1.msra.mxu0 %v262
    %264 = vmatprep.subr.mxu0 0.0
    %v265 = vand.u32 %v83, 4294901760
    %v266 = vsub.f32 %v83, %v265
    %267 = vmatpush1.msra.mxu0 %v266
    %268 = vmatprep.subr.mxu0 0.0
    %v269 = vand.u32 %v84, 4294901760
    %v270 = vsub.f32 %v84, %v269
    %271 = vmatpush1.msra.mxu0 %v270
    %272 = vmatprep.subr.mxu0 0.0
    %v273 = vand.u32 %v85, 4294901760
    %v274 = vsub.f32 %v85, %v273
    %275 = vmatpush1.msra.mxu0 %v274
    %276 = vmatprep.subr.mxu0 0.0
    %277 = vmatpush1.msra.mxu0 0.0
    %278 = vmatprep.subr.mxu0 0.0
    %279 = vmatpush1.msra.mxu0 0.0
    %280 = vmatprep.subr.mxu0 0.0
    %281 = vmatpush1.msra.mxu0 0.0
    %282 = vmatprep.subr.mxu0 0.0
    %283 = vmatpush1.msra.mxu0 0.0
    %284 = vmatprep.subr.mxu0 0.0
    %285 = vmatpush1.msra.mxu0 0.0
    %286 = vmatprep.subr.mxu0 0.0
    %287 = vmatpush1.msra.mxu0 0.0
    %288 = vmatprep.subr.mxu0 0.0
    %289 = vmatpush1.msra.mxu0 0.0
    %290 = vmatprep.subr.mxu0 0.0
    %291 = vmatpush1.msra.mxu0 0.0
    %292 = vmatprep.subr.mxu0 0.0
    %293 = vmatpush1.msra.mxu0 0.0
    %294 = vmatprep.subr.mxu0 0.0
    %295 = vmatpush1.msra.mxu0 0.0
    %296 = vmatprep.subr.mxu0 0.0
    %297 = vmatpush1.msra.mxu0 0.0
    %298 = vmatprep.subr.mxu0 0.0
    %299 = vmatpush1.msra.mxu0 0.0
    %300 = vmatprep.subr.mxu0 0.0
    %301 = vmatpush1.msra.mxu0 0.0
    %302 = vmatprep.subr.mxu0 0.0
    %303 = vmatpush1.msra.mxu0 0.0
    %304 = vmatprep.subr.mxu0 0.0
    %305 = vmatpush1.msra.mxu0 0.0
    %306 = vmatprep.subr.mxu0 0.0
    %307 = vmatpush1.msra.mxu0 0.0
    %308 = vmatprep.subr.mxu0 0.0
    %309 = vmatpush1.msra.mxu0 0.0
    %310 = vmatprep.subr.mxu0 0.0
    %311 = vmatpush1.msra.mxu0 0.0
    %312 = vmatprep.subr.mxu0 0.0
    %313 = vmatpush1.msra.mxu0 0.0
    %314 = vmatprep.subr.mxu0 0.0
    %315 = vmatpush1.msra.mxu0 0.0
    %316 = vmatprep.subr.mxu0 0.0
    %317 = vmatpush1.msra.mxu0 0.0
    %318 = vmatprep.subr.mxu0 0.0
    %319 = vmatpush1.msra.mxu0 0.0
    %320 = vmatprep.subr.mxu0 0.0
    %321 = vmatpush1.msra.mxu0 0.0
    %322 = vmatprep.subr.mxu0 0.0
    %323 = vmatpush1.msra.mxu0 0.0
    %324 = vmatprep.subr.mxu0 0.0
    %325 = vmatpush1.msra.mxu0 0.0
    %326 = vmatprep.subr.mxu0 0.0
    %327 = vmatpush1.msra.mxu0 0.0
    %328 = vmatprep.subr.mxu0 0.0
    %329 = vmatpush1.msra.mxu0 0.0
    %330 = vmatprep.subr.mxu0 0.0
    %331 = vmatpush1.msra.mxu0 0.0
    %332 = vmatprep.mubr.f32.mxu0 0.0
    %v333 = vand.u32 %v88, 4294901760
    %v334 = vsub.f32 %v88, %v333
    %335 = vmatmul.mubr.f32.gmra.mrb[0].mxu0 %v334
    %v336 = vpop.f32.mrb[0].mxu0
    %v337 = vadd.f32 %v257, %v336
    %v338 = vpop.f32.mrb[0].mxu0
    %339 = vdwg.mxu0
    %340 = vmatprep.subr.mxu0 0.0
    %v341 = vand.u32 %v82, 4294901760
    %342 = vmatpush1.msra.mxu0 %v341
    %343 = vmatprep.subr.mxu0 0.0
    %v344 = vand.u32 %v83, 4294901760
    %345 = vmatpush1.msra.mxu0 %v344
    %346 = vmatprep.subr.mxu0 0.0
    %v347 = vand.u32 %v84, 4294901760
    %348 = vmatpush1.msra.mxu0 %v347
    %349 = vmatprep.subr.mxu0 0.0
    %v350 = vand.u32 %v85, 4294901760
    %351 = vmatpush1.msra.mxu0 %v350
    %352 = vmatprep.subr.mxu0 0.0
    %353 = vmatpush1.msra.mxu0 0.0
    %354 = vmatprep.subr.mxu0 0.0
    %355 = vmatpush1.msra.mxu0 0.0
    %356 = vmatprep.subr.mxu0 0.0
    %357 = vmatpush1.msra.mxu0 0.0
    %358 = vmatprep.subr.mxu0 0.0
    %359 = vmatpush1.msra.mxu0 0.0
    %360 = vmatprep.subr.mxu0 0.0
    %361 = vmatpush1.msra.mxu0 0.0
    %362 = vmatprep.subr.mxu0 0.0
    %363 = vmatpush1.msra.mxu0 0.0
    %364 = vmatprep.subr.mxu0 0.0
    %365 = vmatpush1.msra.mxu0 0.0
    %366 = vmatprep.subr.mxu0 0.0
    %367 = vmatpush1.msra.mxu0 0.0
    %368 = vmatprep.subr.mxu0 0.0
    %369 = vmatpush1.msra.mxu0 0.0
    %370 = vmatprep.subr.mxu0 0.0
    %371 = vmatpush1.msra.mxu0 0.0
    %372 = vmatprep.subr.mxu0 0.0
    %373 = vmatpush1.msra.mxu0 0.0
    %374 = vmatprep.subr.mxu0 0.0
    %375 = vmatpush1.msra.mxu0 0.0
    %376 = vmatprep.subr.mxu0 0.0
    %377 = vmatpush1.msra.mxu0 0.0
    %378 = vmatprep.subr.mxu0 0.0
    %379 = vmatpush1.msra.mxu0 0.0
    %380 = vmatprep.subr.mxu0 0.0
    %381 = vmatpush1.msra.mxu0 0.0
    %382 = vmatprep.subr.mxu0 0.0
    %383 = vmatpush1.msra.mxu0 0.0
    %384 = vmatprep.subr.mxu0 0.0
    %385 = vmatpush1.msra.mxu0 0.0
    %386 = vmatprep.subr.mxu0 0.0
    %387 = vmatpush1.msra.mxu0 0.0
    %388 = vmatprep.subr.mxu0 0.0
    %389 = vmatpush1.msra.mxu0 0.0
    %390 = vmatprep.subr.mxu0 0.0
    %391 = vmatpush1.msra.mxu0 0.0
    %392 = vmatprep.subr.mxu0 0.0
    %393 = vmatpush1.msra.mxu0 0.0
    %394 = vmatprep.subr.mxu0 0.0
    %395 = vmatpush1.msra.mxu0 0.0
    %396 = vmatprep.subr.mxu0 0.0
    %397 = vmatpush1.msra.mxu0 0.0
    %398 = vmatprep.subr.mxu0 0.0
    %399 = vmatpush1.msra.mxu0 0.0
    %400 = vmatprep.subr.mxu0 0.0
    %401 = vmatpush1.msra.mxu0 0.0
    %402 = vmatprep.subr.mxu0 0.0
    %403 = vmatpush1.msra.mxu0 0.0
    %404 = vmatprep.subr.mxu0 0.0
    %405 = vmatpush1.msra.mxu0 0.0
    %406 = vmatprep.subr.mxu0 0.0
    %407 = vmatpush1.msra.mxu0 0.0
    %408 = vmatprep.mubr.f32.mxu0 0.0
    %v409 = vand.u32 %v88, 4294901760
    %v410 = vsub.f32 %v88, %v409
    %v411 = vand.u32 %v410, 4294901760
    %412 = vmatmul.mubr.f32.gmra.mrb[0].mxu0 %v411
    %v413 = vpop.f32.mrb[0].mxu0
    %v414 = vadd.f32 %v337, %v413
    %v415 = vpop.f32.mrb[0].mxu0
    %416 = vdwg.mxu0
    %417 = vmatprep.subr.mxu0 0.0
    %v418 = vand.u32 %v82, 4294901760
    %v419 = vsub.f32 %v82, %v418
    %v420 = vand.u32 %v419, 4294901760
    %421 = vmatpush1.msra.mxu0 %v420
    %422 = vmatprep.subr.mxu0 0.0
    %v423 = vand.u32 %v83, 4294901760
    %v424 = vsub.f32 %v83, %v423
    %v425 = vand.u32 %v424, 4294901760
    %426 = vmatpush1.msra.mxu0 %v425
    %427 = vmatprep.subr.mxu0 0.0
    %v428 = vand.u32 %v84, 4294901760
    %v429 = vsub.f32 %v84, %v428
    %v430 = vand.u32 %v429, 4294901760
    %431 = vmatpush1.msra.mxu0 %v430
    %432 = vmatprep.subr.mxu0 0.0
    %v433 = vand.u32 %v85, 4294901760
    %v434 = vsub.f32 %v85, %v433
    %v435 = vand.u32 %v434, 4294901760
    %436 = vmatpush1.msra.mxu0 %v435
    %437 = vmatprep.subr.mxu0 0.0
    %438 = vmatpush1.msra.mxu0 0.0
    %439 = vmatprep.subr.mxu0 0.0
    %440 = vmatpush1.msra.mxu0 0.0
    %441 = vmatprep.subr.mxu0 0.0
    %442 = vmatpush1.msra.mxu0 0.0
    %443 = vmatprep.subr.mxu0 0.0
    %444 = vmatpush1.msra.mxu0 0.0
    %445 = vmatprep.subr.mxu0 0.0
    %446 = vmatpush1.msra.mxu0 0.0
    %447 = vmatprep.subr.mxu0 0.0
    %448 = vmatpush1.msra.mxu0 0.0
    %449 = vmatprep.subr.mxu0 0.0
    %450 = vmatpush1.msra.mxu0 0.0
    %451 = vmatprep.subr.mxu0 0.0
    %452 = vmatpush1.msra.mxu0 0.0
    %453 = vmatprep.subr.mxu0 0.0
    %454 = vmatpush1.msra.mxu0 0.0
    %455 = vmatprep.subr.mxu0 0.0
    %456 = vmatpush1.msra.mxu0 0.0
    %457 = vmatprep.subr.mxu0 0.0
    %458 = vmatpush1.msra.mxu0 0.0
    %459 = vmatprep.subr.mxu0 0.0
    %460 = vmatpush1.msra.mxu0 0.0
    %461 = vmatprep.subr.mxu0 0.0
    %462 = vmatpush1.msra.mxu0 0.0
    %463 = vmatprep.subr.mxu0 0.0
    %464 = vmatpush1.msra.mxu0 0.0
    %465 = vmatprep.subr.mxu0 0.0
    %466 = vmatpush1.msra.mxu0 0.0
    %467 = vmatprep.subr.mxu0 0.0
    %468 = vmatpush1.msra.mxu0 0.0
    %469 = vmatprep.subr.mxu0 0.0
    %470 = vmatpush1.msra.mxu0 0.0
    %471 = vmatprep.subr.mxu0 0.0
    %472 = vmatpush1.msra.mxu0 0.0
    %473 = vmatprep.subr.mxu0 0.0
    %474 = vmatpush1.msra.mxu0 0.0
    %475 = vmatprep.subr.mxu0 0.0
    %476 = vmatpush1.msra.mxu0 0.0
    %477 = vmatprep.subr.mxu0 0.0
    %478 = vmatpush1.msra.mxu0 0.0
    %479 = vmatprep.subr.mxu0 0.0
    %480 = vmatpush1.msra.mxu0 0.0
    %481 = vmatprep.subr.mxu0 0.0
    %482 = vmatpush1.msra.mxu0 0.0
    %483 = vmatprep.subr.mxu0 0.0
    %484 = vmatpush1.msra.mxu0 0.0
    %485 = vmatprep.subr.mxu0 0.0
    %486 = vmatpush1.msra.mxu0 0.0
    %487 = vmatprep.subr.mxu0 0.0
    %488 = vmatpush1.msra.mxu0 0.0
    %489 = vmatprep.subr.mxu0 0.0
    %490 = vmatpush1.msra.mxu0 0.0
    %491 = vmatprep.subr.mxu0 0.0
    %492 = vmatpush1.msra.mxu0 0.0
    %493 = vmatprep.mubr.f32.mxu0 0.0
    %v494 = vand.u32 %v88, 4294901760
    %495 = vmatmul.mubr.f32.gmra.mrb[0].mxu0 %v494
    %v496 = vpop.f32.mrb[0].mxu0
    %v497 = vadd.f32 %v414, %v496
    %v498 = vpop.f32.mrb[0].mxu0
    %499 = vdwg.mxu0
    %500 = vmatprep.subr.mxu0 0.0
    %v501 = vand.u32 %v82, 4294901760
    %502 = vmatpush1.msra.mxu0 %v501
    %503 = vmatprep.subr.mxu0 0.0
    %v504 = vand.u32 %v83, 4294901760
    %505 = vmatpush1.msra.mxu0 %v504
    %506 = vmatprep.subr.mxu0 0.0
    %v507 = vand.u32 %v84, 4294901760
    %508 = vmatpush1.msra.mxu0 %v507
    %509 = vmatprep.subr.mxu0 0.0
    %v510 = vand.u32 %v85, 4294901760
    %511 = vmatpush1.msra.mxu0 %v510
    %512 = vmatprep.subr.mxu0 0.0
    %513 = vmatpush1.msra.mxu0 0.0
    %514 = vmatprep.subr.mxu0 0.0
    %515 = vmatpush1.msra.mxu0 0.0
    %516 = vmatprep.subr.mxu0 0.0
    %517 = vmatpush1.msra.mxu0 0.0
    %518 = vmatprep.subr.mxu0 0.0
    %519 = vmatpush1.msra.mxu0 0.0
    %520 = vmatprep.subr.mxu0 0.0
    %521 = vmatpush1.msra.mxu0 0.0
    %522 = vmatprep.subr.mxu0 0.0
    %523 = vmatpush1.msra.mxu0 0.0
    %524 = vmatprep.subr.mxu0 0.0
    %525 = vmatpush1.msra.mxu0 0.0
    %526 = vmatprep.subr.mxu0 0.0
    %527 = vmatpush1.msra.mxu0 0.0
    %528 = vmatprep.subr.mxu0 0.0
    %529 = vmatpush1.msra.mxu0 0.0
    %530 = vmatprep.subr.mxu0 0.0
    %531 = vmatpush1.msra.mxu0 0.0
    %532 = vmatprep.subr.mxu0 0.0
    %533 = vmatpush1.msra.mxu0 0.0
    %534 = vmatprep.subr.mxu0 0.0
    %535 = vmatpush1.msra.mxu0 0.0
    %536 = vmatprep.subr.mxu0 0.0
    %537 = vmatpush1.msra.mxu0 0.0
    %538 = vmatprep.subr.mxu0 0.0
    %539 = vmatpush1.msra.mxu0 0.0
    %540 = vmatprep.subr.mxu0 0.0
    %541 = vmatpush1.msra.mxu0 0.0
    %542 = vmatprep.subr.mxu0 0.0
    %543 = vmatpush1.msra.mxu0 0.0
    %544 = vmatprep.subr.mxu0 0.0
    %545 = vmatpush1.msra.mxu0 0.0
    %546 = vmatprep.subr.mxu0 0.0
    %547 = vmatpush1.msra.mxu0 0.0
    %548 = vmatprep.subr.mxu0 0.0
    %549 = vmatpush1.msra.mxu0 0.0
    %550 = vmatprep.subr.mxu0 0.0
    %551 = vmatpush1.msra.mxu0 0.0
    %552 = vmatprep.subr.mxu0 0.0
    %553 = vmatpush1.msra.mxu0 0.0
    %554 = vmatprep.subr.mxu0 0.0
    %555 = vmatpush1.msra.mxu0 0.0
    %556 = vmatprep.subr.mxu0 0.0
    %557 = vmatpush1.msra.mxu0 0.0
    %558 = vmatprep.subr.mxu0 0.0
    %559 = vmatpush1.msra.mxu0 0.0
    %560 = vmatprep.subr.mxu0 0.0
    %561 = vmatpush1.msra.mxu0 0.0
    %562 = vmatprep.subr.mxu0 0.0
    %563 = vmatpush1.msra.mxu0 0.0
    %564 = vmatprep.subr.mxu0 0.0
    %565 = vmatpush1.msra.mxu0 0.0
    %566 = vmatprep.subr.mxu0 0.0
    %567 = vmatpush1.msra.mxu0 0.0
    %568 = vmatprep.mubr.f32.mxu0 0.0
    %v569 = vand.u32 %v88, 4294901760
    %570 = vmatmul.mubr.f32.gmra.mrb[0].mxu0 %v569
    %v571 = vpop.f32.mrb[0].mxu0
    %v572 = vadd.f32 %v497, %v571
    %v573 = vpop.f32.mrb[0].mxu0
    %574 = vdwg.mxu0
    %vm575 = vcmp.eq.f32.partialorder %v55, 0.0
    %vm576 = vcmp.eq.f32.partialorder %v572, 1.0
    %vm577 = vmand %vm575, %vm576
    %vm578 = vmxor %vm577, 1
    %vm579 = vmand %vm62, %vm578
    %vm580 = vcmp.eq.f32.partialorder %v55, 1.0
    %vm581 = vcmp.eq.f32.partialorder %v572, 0.0
    %vm582 = vmand %vm580, %vm581
    %vm583 = vmxor %vm582, 1
    %vm584 = vmand %vm579, %vm583
    %v585 = vsub.f32 %v572, %v55
    %v586 = vmul.f32 %v585, %v585
    %v587 = vadd.f32 %v586, 1.0
    %v589 = vrot.slane %v586, 1
    %v591 = vadd.f32 %v587, %v589
    %v592 = vrot.slane %v586, 2
    %v594 = vadd.f32 %v591, %v592
    %v595 = vrcp.pop %v594
    %v596 = vmul.f32 %v594, %v595
    %v597 = vsub.f32 2.0, %v596
    %v598 = vmul.f32 %v595, %v597
    %v599 = vsel %vm584, 1, 0
    %v600 = vcvt.s32.f32 %v599
    %v602 = vrot.slane %v598, 1
    %v604 = vmul.f32 %v600, %v602
    %v605 = vmax.f32 %v55, 0.0
    %v606 = vmul.f32 %v605, 3.0
    %v607 = vmax.f32 %v572, 0.0
    %v608 = vadd.f32 %v606, %v607
    %vm609 = vcmp.eq.f32.partialorder %v608, 0.0
    %s610 = sld [smem:[#allocation8]]
    %v611 = vstv %s610
    %v612 = vsel %vm609, %v611, 0.0
    %vm613 = vcmp.eq.f32.partialorder %v608, 1.0
    %s614 = sld [smem:[#allocation8 + $0x1]]
    %v615 = vstv %s614
    %v616 = vsel %vm613, %v615, %v612
    %vm617 = vcmp.eq.f32.partialorder %v608, 2.0
    %s618 = sld [smem:[#allocation8 + $0x2]]
    %v619 = vstv %s618
    %v620 = vsel %vm617, %v619, %v616
    %vm621 = vcmp.eq.f32.partialorder %v608, 3.0
    %s622 = sld [smem:[#allocation8 + $0x3]]
    %v623 = vstv %s622
    %v624 = vsel %vm621, %v623, %v620
    %vm625 = vcmp.eq.f32.partialorder %v608, 4.0
    %s626 = sld [smem:[#allocation8 + $0x4]]
    %v627 = vstv %s626
    %v628 = vsel %vm625, %v627, %v624
    %vm629 = vcmp.eq.f32.partialorder %v608, 5.0
    %s630 = sld [smem:[#allocation8 + $0x5]]
    %v631 = vstv %s630
    %v632 = vsel %vm629, %v631, %v628
    %vm633 = vcmp.eq.f32.partialorder %v608, 6.0
    %s634 = sld [smem:[#allocation8 + $0x6]]
    %v635 = vstv %s634
    %v636 = vsel %vm633, %v635, %v632
    %vm637 = vcmp.eq.f32.partialorder %v608, 7.0
    %s638 = sld [smem:[#allocation8 + $0x7]]
    %v639 = vstv %s638
    %v640 = vsel %vm637, %v639, %v636
    %vm641 = vcmp.eq.f32.partialorder %v608, 8.0
    %s642 = sld [smem:[#allocation8 + $0x8]]
    %v643 = vstv %s642
    %v644 = vsel %vm641, %v643, %v640
    %v645 = vmul.f32 %v644, %v604
    %v646 = vadd.f32 %v645, 0.0
    %v647 = vld [vmem:[%s2 + $0x1] sm:$0x1]
    %vm648 = vcmp.ge.s32.totalorder %v647, 0
    %v649 = vadd.s32 %v647, %v60
    %v650 = vsel %vm648, %v649, 4294967295
    %v651 = vlaneseq
    %v652 = vshrl.u32 %v651, 7
    %v653 = vsub.s32 0, %v652
    %v654 = vrot.slane %v650, %v653
    %vm655 = vcmp.eq.s32.totalorder %v66, %v654
    %vm656 = vcmp.eq.s32.totalorder %v67, %v654
    %vm657 = vcmp.eq.s32.totalorder %v68, %v654
    %vm658 = vcmp.eq.s32.totalorder %v69, %v654
    %v659 = vsel %vm655, 1, 0
    %v660 = vsel %vm656, 1, 0
    %v661 = vsel %vm657, 1, 0
    %v662 = vsel %vm658, 1, 0
    %v663 = vcvt.s32.f32 %v659
    %v664 = vcvt.s32.f32 %v660
    %v665 = vcvt.s32.f32 %v661
    %v666 = vcvt.s32.f32 %v662
    %667 = vmatprep.subr.mxu0 0.0
    %v668 = vand.u32 %v663, 4294901760
    %669 = vmatpush1.msra.mxu0 %v668
    %670 = vmatprep.subr.mxu0 0.0
    %v671 = vand.u32 %v664, 4294901760
    %672 = vmatpush1.msra.mxu0 %v671
    %673 = vmatprep.subr.mxu0 0.0
    %v674 = vand.u32 %v665, 4294901760
    %675 = vmatpush1.msra.mxu0 %v674
    %676 = vmatprep.subr.mxu0 0.0
    %v677 = vand.u32 %v666, 4294901760
    %678 = vmatpush1.msra.mxu0 %v677
    %679 = vmatprep.subr.mxu0 0.0
    %680 = vmatpush1.msra.mxu0 0.0
    %681 = vmatprep.subr.mxu0 0.0
    %682 = vmatpush1.msra.mxu0 0.0
    %683 = vmatprep.subr.mxu0 0.0
    %684 = vmatpush1.msra.mxu0 0.0
    %685 = vmatprep.subr.mxu0 0.0
    %686 = vmatpush1.msra.mxu0 0.0
    %687 = vmatprep.subr.mxu0 0.0
    %688 = vmatpush1.msra.mxu0 0.0
    %689 = vmatprep.subr.mxu0 0.0
    %690 = vmatpush1.msra.mxu0 0.0
    %691 = vmatprep.subr.mxu0 0.0
    %692 = vmatpush1.msra.mxu0 0.0
    %693 = vmatprep.subr.mxu0 0.0
    %694 = vmatpush1.msra.mxu0 0.0
    %695 = vmatprep.subr.mxu0 0.0
    %696 = vmatpush1.msra.mxu0 0.0
    %697 = vmatprep.subr.mxu0 0.0
    %698 = vmatpush1.msra.mxu0 0.0
    %699 = vmatprep.subr.mxu0 0.0
    %700 = vmatpush1.msra.mxu0 0.0
    %701 = vmatprep.subr.mxu0 0.0
    %702 = vmatpush1.msra.mxu0 0.0
    %703 = vmatprep.subr.mxu0 0.0
    %704 = vmatpush1.msra.mxu0 0.0
    %705 = vmatprep.subr.mxu0 0.0
    %706 = vmatpush1.msra.mxu0 0.0
    %707 = vmatprep.subr.mxu0 0.0
    %708 = vmatpush1.msra.mxu0 0.0
    %709 = vmatprep.subr.mxu0 0.0
    %710 = vmatpush1.msra.mxu0 0.0
    %711 = vmatprep.subr.mxu0 0.0
    %712 = vmatpush1.msra.mxu0 0.0
    %713 = vmatprep.subr.mxu0 0.0
    %714 = vmatpush1.msra.mxu0 0.0
    %715 = vmatprep.subr.mxu0 0.0
    %716 = vmatpush1.msra.mxu0 0.0
    %717 = vmatprep.subr.mxu0 0.0
    %718 = vmatpush1.msra.mxu0 0.0
    %719 = vmatprep.subr.mxu0 0.0
    %720 = vmatpush1.msra.mxu0 0.0
    %721 = vmatprep.subr.mxu0 0.0
    %722 = vmatpush1.msra.mxu0 0.0
    %723 = vmatprep.subr.mxu0 0.0
    %724 = vmatpush1.msra.mxu0 0.0
    %725 = vmatprep.subr.mxu0 0.0
    %726 = vmatpush1.msra.mxu0 0.0
    %727 = vmatprep.subr.mxu0 0.0
    %728 = vmatpush1.msra.mxu0 0.0
    %729 = vmatprep.subr.mxu0 0.0
    %730 = vmatpush1.msra.mxu0 0.0
    %731 = vmatprep.subr.mxu0 0.0
    %732 = vmatpush1.msra.mxu0 0.0
    %733 = vmatprep.subr.mxu0 0.0
    %734 = vmatpush1.msra.mxu0 0.0
    %735 = vmatprep.mubr.f32.mxu0 0.0
    %v736 = vand.u32 %v88, 4294901760
    %v737 = vsub.f32 %v88, %v736
    %v738 = vand.u32 %v737, 4294901760
    %v739 = vsub.f32 %v737, %v738
    %v740 = vand.u32 %v739, 4294901760
    %741 = vmatmul.mubr.f32.gmra.mrb[0].mxu0 %v740
    %v742 = vpop.f32.mrb[0].mxu0
    %v743 = vadd.f32 0.0, %v742
    %v744 = vpop.f32.mrb[0].mxu0
    %745 = vdwg.mxu0
    %746 = vmatprep.subr.mxu0 0.0
    %v747 = vand.u32 %v663, 4294901760
    %v748 = vsub.f32 %v663, %v747
    %v749 = vand.u32 %v748, 4294901760
    %v750 = vsub.f32 %v748, %v749
    %v751 = vand.u32 %v750, 4294901760
    %752 = vmatpush1.msra.mxu0 %v751
    %753 = vmatprep.subr.mxu0 0.0
    %v754 = vand.u32 %v664, 4294901760
    %v755 = vsub.f32 %v664, %v754
    %v756 = vand.u32 %v755, 4294901760
    %v757 = vsub.f32 %v755, %v756
    %v758 = vand.u32 %v757, 4294901760
    %759 = vmatpush1.msra.mxu0 %v758
    %760 = vmatprep.subr.mxu0 0.0
    %v761 = vand.u32 %v665, 4294901760
    %v762 = vsub.f32 %v665, %v761
    %v763 = vand.u32 %v762, 4294901760
    %v764 = vsub.f32 %v762, %v763
    %v765 = vand.u32 %v764, 4294901760
    %766 = vmatpush1.msra.mxu0 %v765
    %767 = vmatprep.subr.mxu0 0.0
    %v768 = vand.u32 %v666, 4294901760
    %v769 = vsub.f32 %v666, %v768
    %v770 = vand.u32 %v769, 4294901760
    %v771 = vsub.f32 %v769, %v770
    %v772 = vand.u32 %v771, 4294901760
    %773 = vmatpush1.msra.mxu0 %v772
    %774 = vmatprep.subr.mxu0 0.0
    %775 = vmatpush1.msra.mxu0 0.0
    %776 = vmatprep.subr.mxu0 0.0
    %777 = vmatpush1.msra.mxu0 0.0
    %778 = vmatprep.subr.mxu0 0.0
    %779 = vmatpush1.msra.mxu0 0.0
    %780 = vmatprep.subr.mxu0 0.0
    %781 = vmatpush1.msra.mxu0 0.0
    %782 = vmatprep.subr.mxu0 0.0
    %783 = vmatpush1.msra.mxu0 0.0
    %784 = vmatprep.subr.mxu0 0.0
    %785 = vmatpush1.msra.mxu0 0.0
    %786 = vmatprep.subr.mxu0 0.0
    %787 = vmatpush1.msra.mxu0 0.0
    %788 = vmatprep.subr.mxu0 0.0
    %789 = vmatpush1.msra.mxu0 0.0
    %790 = vmatprep.subr.mxu0 0.0
    %791 = vmatpush1.msra.mxu0 0.0
    %792 = vmatprep.subr.mxu0 0.0
    %793 = vmatpush1.msra.mxu0 0.0
    %794 = vmatprep.subr.mxu0 0.0
    %795 = vmatpush1.msra.mxu0 0.0
    %796 = vmatprep.subr.mxu0 0.0
    %797 = vmatpush1.msra.mxu0 0.0
    %798 = vmatprep.subr.mxu0 0.0
    %799 = vmatpush1.msra.mxu0 0.0
    %800 = vmatprep.subr.mxu0 0.0
    %801 = vmatpush1.msra.mxu0 0.0
    %802 = vmatprep.subr.mxu0 0.0
    %803 = vmatpush1.msra.mxu0 0.0
    %804 = vmatprep.subr.mxu0 0.0
    %805 = vmatpush1.msra.mxu0 0.0
    %806 = vmatprep.subr.mxu0 0.0
    %807 = vmatpush1.msra.mxu0 0.0
    %808 = vmatprep.subr.mxu0 0.0
    %809 = vmatpush1.msra.mxu0 0.0
    %810 = vmatprep.subr.mxu0 0.0
    %811 = vmatpush1.msra.mxu0 0.0
    %812 = vmatprep.subr.mxu0 0.0
    %813 = vmatpush1.msra.mxu0 0.0
    %814 = vmatprep.subr.mxu0 0.0
    %815 = vmatpush1.msra.mxu0 0.0
    %816 = vmatprep.subr.mxu0 0.0
    %817 = vmatpush1.msra.mxu0 0.0
    %818 = vmatprep.subr.mxu0 0.0
    %819 = vmatpush1.msra.mxu0 0.0
    %820 = vmatprep.subr.mxu0 0.0
    %821 = vmatpush1.msra.mxu0 0.0
    %822 = vmatprep.subr.mxu0 0.0
    %823 = vmatpush1.msra.mxu0 0.0
    %824 = vmatprep.subr.mxu0 0.0
    %825 = vmatpush1.msra.mxu0 0.0
    %826 = vmatprep.subr.mxu0 0.0
    %827 = vmatpush1.msra.mxu0 0.0
    %828 = vmatprep.subr.mxu0 0.0
    %829 = vmatpush1.msra.mxu0 0.0
    %830 = vmatprep.mubr.f32.mxu0 0.0
    %v831 = vand.u32 %v88, 4294901760
    %832 = vmatmul.mubr.f32.gmra.mrb[0].mxu0 %v831
    %v833 = vpop.f32.mrb[0].mxu0
    %v834 = vadd.f32 %v743, %v833
    %v835 = vpop.f32.mrb[0].mxu0
    %836 = vdwg.mxu0
    %837 = vmatprep.subr.mxu0 0.0
    %v838 = vand.u32 %v663, 4294901760
    %v839 = vsub.f32 %v663, %v838
    %840 = vmatpush1.msra.mxu0 %v839
    %841 = vmatprep.subr.mxu0 0.0
    %v842 = vand.u32 %v664, 4294901760
    %v843 = vsub.f32 %v664, %v842
    %844 = vmatpush1.msra.mxu0 %v843
    %845 = vmatprep.subr.mxu0 0.0
    %v846 = vand.u32 %v665, 4294901760
    %v847 = vsub.f32 %v665, %v846
    %848 = vmatpush1.msra.mxu0 %v847
    %849 = vmatprep.subr.mxu0 0.0
    %v850 = vand.u32 %v666, 4294901760
    %v851 = vsub.f32 %v666, %v850
    %852 = vmatpush1.msra.mxu0 %v851
    %853 = vmatprep.subr.mxu0 0.0
    %854 = vmatpush1.msra.mxu0 0.0
    %855 = vmatprep.subr.mxu0 0.0
    %856 = vmatpush1.msra.mxu0 0.0
    %857 = vmatprep.subr.mxu0 0.0
    %858 = vmatpush1.msra.mxu0 0.0
    %859 = vmatprep.subr.mxu0 0.0
    %860 = vmatpush1.msra.mxu0 0.0
    %861 = vmatprep.subr.mxu0 0.0
    %862 = vmatpush1.msra.mxu0 0.0
    %863 = vmatprep.subr.mxu0 0.0
    %864 = vmatpush1.msra.mxu0 0.0
    %865 = vmatprep.subr.mxu0 0.0
    %866 = vmatpush1.msra.mxu0 0.0
    %867 = vmatprep.subr.mxu0 0.0
    %868 = vmatpush1.msra.mxu0 0.0
    %869 = vmatprep.subr.mxu0 0.0
    %870 = vmatpush1.msra.mxu0 0.0
    %871 = vmatprep.subr.mxu0 0.0
    %872 = vmatpush1.msra.mxu0 0.0
    %873 = vmatprep.subr.mxu0 0.0
    %874 = vmatpush1.msra.mxu0 0.0
    %875 = vmatprep.subr.mxu0 0.0
    %876 = vmatpush1.msra.mxu0 0.0
    %877 = vmatprep.subr.mxu0 0.0
    %878 = vmatpush1.msra.mxu0 0.0
    %879 = vmatprep.subr.mxu0 0.0
    %880 = vmatpush1.msra.mxu0 0.0
    %881 = vmatprep.subr.mxu0 0.0
    %882 = vmatpush1.msra.mxu0 0.0
    %883 = vmatprep.subr.mxu0 0.0
    %884 = vmatpush1.msra.mxu0 0.0
    %885 = vmatprep.subr.mxu0 0.0
    %886 = vmatpush1.msra.mxu0 0.0
    %887 = vmatprep.subr.mxu0 0.0
    %888 = vmatpush1.msra.mxu0 0.0
    %889 = vmatprep.subr.mxu0 0.0
    %890 = vmatpush1.msra.mxu0 0.0
    %891 = vmatprep.subr.mxu0 0.0
    %892 = vmatpush1.msra.mxu0 0.0
    %893 = vmatprep.subr.mxu0 0.0
    %894 = vmatpush1.msra.mxu0 0.0
    %895 = vmatprep.subr.mxu0 0.0
    %896 = vmatpush1.msra.mxu0 0.0
    %897 = vmatprep.subr.mxu0 0.0
    %898 = vmatpush1.msra.mxu0 0.0
    %899 = vmatprep.subr.mxu0 0.0
    %900 = vmatpush1.msra.mxu0 0.0
    %901 = vmatprep.subr.mxu0 0.0
    %902 = vmatpush1.msra.mxu0 0.0
    %903 = vmatprep.subr.mxu0 0.0
    %904 = vmatpush1.msra.mxu0 0.0
    %905 = vmatprep.subr.mxu0 0.0
    %906 = vmatpush1.msra.mxu0 0.0
    %907 = vmatprep.subr.mxu0 0.0
    %908 = vmatpush1.msra.mxu0 0.0
    %909 = vmatprep.mubr.f32.mxu0 0.0
    %v910 = vand.u32 %v88, 4294901760
    %v911 = vsub.f32 %v88, %v910
    %912 = vmatmul.mubr.f32.gmra.mrb[0].mxu0 %v911
    %v913 = vpop.f32.mrb[0].mxu0
    %v914 = vadd.f32 %v834, %v913
    %v915 = vpop.f32.mrb[0].mxu0
    %916 = vdwg.mxu0
    %917 = vmatprep.subr.mxu0 0.0
    %v918 = vand.u32 %v663, 4294901760
    %919 = vmatpush1.msra.mxu0 %v918
    %920 = vmatprep.subr.mxu0 0.0
    %v921 = vand.u32 %v664, 4294901760
    %922 = vmatpush1.msra.mxu0 %v921
    %923 = vmatprep.subr.mxu0 0.0
    %v924 = vand.u32 %v665, 4294901760
    %925 = vmatpush1.msra.mxu0 %v924
    %926 = vmatprep.subr.mxu0 0.0
    %v927 = vand.u32 %v666, 4294901760
    %928 = vmatpush1.msra.mxu0 %v927
    %929 = vmatprep.subr.mxu0 0.0
    %930 = vmatpush1.msra.mxu0 0.0
    %931 = vmatprep.subr.mxu0 0.0
    %932 = vmatpush1.msra.mxu0 0.0
    %933 = vmatprep.subr.mxu0 0.0
    %934 = vmatpush1.msra.mxu0 0.0
    %935 = vmatprep.subr.mxu0 0.0
    %936 = vmatpush1.msra.mxu0 0.0
    %937 = vmatprep.subr.mxu0 0.0
    %938 = vmatpush1.msra.mxu0 0.0
    %939 = vmatprep.subr.mxu0 0.0
    %940 = vmatpush1.msra.mxu0 0.0
    %941 = vmatprep.subr.mxu0 0.0
    %942 = vmatpush1.msra.mxu0 0.0
    %943 = vmatprep.subr.mxu0 0.0
    %944 = vmatpush1.msra.mxu0 0.0
    %945 = vmatprep.subr.mxu0 0.0
    %946 = vmatpush1.msra.mxu0 0.0
    %947 = vmatprep.subr.mxu0 0.0
    %948 = vmatpush1.msra.mxu0 0.0
    %949 = vmatprep.subr.mxu0 0.0
    %950 = vmatpush1.msra.mxu0 0.0
    %951 = vmatprep.subr.mxu0 0.0
    %952 = vmatpush1.msra.mxu0 0.0
    %953 = vmatprep.subr.mxu0 0.0
    %954 = vmatpush1.msra.mxu0 0.0
    %955 = vmatprep.subr.mxu0 0.0
    %956 = vmatpush1.msra.mxu0 0.0
    %957 = vmatprep.subr.mxu0 0.0
    %958 = vmatpush1.msra.mxu0 0.0
    %959 = vmatprep.subr.mxu0 0.0
    %960 = vmatpush1.msra.mxu0 0.0
    %961 = vmatprep.subr.mxu0 0.0
    %962 = vmatpush1.msra.mxu0 0.0
    %963 = vmatprep.subr.mxu0 0.0
    %964 = vmatpush1.msra.mxu0 0.0
    %965 = vmatprep.subr.mxu0 0.0
    %966 = vmatpush1.msra.mxu0 0.0
    %967 = vmatprep.subr.mxu0 0.0
    %968 = vmatpush1.msra.mxu0 0.0
    %969 = vmatprep.subr.mxu0 0.0
    %970 = vmatpush1.msra.mxu0 0.0
    %971 = vmatprep.subr.mxu0 0.0
    %972 = vmatpush1.msra.mxu0 0.0
    %973 = vmatprep.subr.mxu0 0.0
    %974 = vmatpush1.msra.mxu0 0.0
    %975 = vmatprep.subr.mxu0 0.0
    %976 = vmatpush1.msra.mxu0 0.0
    %977 = vmatprep.subr.mxu0 0.0
    %978 = vmatpush1.msra.mxu0 0.0
    %979 = vmatprep.subr.mxu0 0.0
    %980 = vmatpush1.msra.mxu0 0.0
    %981 = vmatprep.subr.mxu0 0.0
    %982 = vmatpush1.msra.mxu0 0.0
    %983 = vmatprep.subr.mxu0 0.0
    %984 = vmatpush1.msra.mxu0 0.0
    %985 = vmatprep.mubr.f32.mxu0 0.0
    %v986 = vand.u32 %v88, 4294901760
    %v987 = vsub.f32 %v88, %v986
    %v988 = vand.u32 %v987, 4294901760
    %989 = vmatmul.mubr.f32.gmra.mrb[0].mxu0 %v988
    %v990 = vpop.f32.mrb[0].mxu0
    %v991 = vadd.f32 %v914, %v990
    %v992 = vpop.f32.mrb[0].mxu0
    %993 = vdwg.mxu0
    %994 = vmatprep.subr.mxu0 0.0
    %v995 = vand.u32 %v663, 4294901760
    %v996 = vsub.f32 %v663, %v995
    %v997 = vand.u32 %v996, 4294901760
    %998 = vmatpush1.msra.mxu0 %v997
    %999 = vmatprep.subr.mxu0 0.0
    %v1000 = vand.u32 %v664, 4294901760
    %v1001 = vsub.f32 %v664, %v1000
    %v1002 = vand.u32 %v1001, 4294901760
    %1003 = vmatpush1.msra.mxu0 %v1002
    %1004 = vmatprep.subr.mxu0 0.0
    %v1005 = vand.u32 %v665, 4294901760
    %v1006 = vsub.f32 %v665, %v1005
    %v1007 = vand.u32 %v1006, 4294901760
    %1008 = vmatpush1.msra.mxu0 %v1007
    %1009 = vmatprep.subr.mxu0 0.0
    %v1010 = vand.u32 %v666, 4294901760
    %v1011 = vsub.f32 %v666, %v1010
    %v1012 = vand.u32 %v1011, 4294901760
    %1013 = vmatpush1.msra.mxu0 %v1012
    %1014 = vmatprep.subr.mxu0 0.0
    %1015 = vmatpush1.msra.mxu0 0.0
    %1016 = vmatprep.subr.mxu0 0.0
    %1017 = vmatpush1.msra.mxu0 0.0
    %1018 = vmatprep.subr.mxu0 0.0
    %1019 = vmatpush1.msra.mxu0 0.0
    %1020 = vmatprep.subr.mxu0 0.0
    %1021 = vmatpush1.msra.mxu0 0.0
    %1022 = vmatprep.subr.mxu0 0.0
    %1023 = vmatpush1.msra.mxu0 0.0
    %1024 = vmatprep.subr.mxu0 0.0
    %1025 = vmatpush1.msra.mxu0 0.0
    %1026 = vmatprep.subr.mxu0 0.0
    %1027 = vmatpush1.msra.mxu0 0.0
    %1028 = vmatprep.subr.mxu0 0.0
    %1029 = vmatpush1.msra.mxu0 0.0
    %1030 = vmatprep.subr.mxu0 0.0
    %1031 = vmatpush1.msra.mxu0 0.0
    %1032 = vmatprep.subr.mxu0 0.0
    %1033 = vmatpush1.msra.mxu0 0.0
    %1034 = vmatprep.subr.mxu0 0.0
    %1035 = vmatpush1.msra.mxu0 0.0
    %1036 = vmatprep.subr.mxu0 0.0
    %1037 = vmatpush1.msra.mxu0 0.0
    %1038 = vmatprep.subr.mxu0 0.0
    %1039 = vmatpush1.msra.mxu0 0.0
    %1040 = vmatprep.subr.mxu0 0.0
    %1041 = vmatpush1.msra.mxu0 0.0
    %1042 = vmatprep.subr.mxu0 0.0
    %1043 = vmatpush1.msra.mxu0 0.0
    %1044 = vmatprep.subr.mxu0 0.0
    %1045 = vmatpush1.msra.mxu0 0.0
    %1046 = vmatprep.subr.mxu0 0.0
    %1047 = vmatpush1.msra.mxu0 0.0
    %1048 = vmatprep.subr.mxu0 0.0
    %1049 = vmatpush1.msra.mxu0 0.0
    %1050 = vmatprep.subr.mxu0 0.0
    %1051 = vmatpush1.msra.mxu0 0.0
    %1052 = vmatprep.subr.mxu0 0.0
    %1053 = vmatpush1.msra.mxu0 0.0
    %1054 = vmatprep.subr.mxu0 0.0
    %1055 = vmatpush1.msra.mxu0 0.0
    %1056 = vmatprep.subr.mxu0 0.0
    %1057 = vmatpush1.msra.mxu0 0.0
    %1058 = vmatprep.subr.mxu0 0.0
    %1059 = vmatpush1.msra.mxu0 0.0
    %1060 = vmatprep.subr.mxu0 0.0
    %1061 = vmatpush1.msra.mxu0 0.0
    %1062 = vmatprep.subr.mxu0 0.0
    %1063 = vmatpush1.msra.mxu0 0.0
    %1064 = vmatprep.subr.mxu0 0.0
    %1065 = vmatpush1.msra.mxu0 0.0
    %1066 = vmatprep.subr.mxu0 0.0
    %1067 = vmatpush1.msra.mxu0 0.0
    %1068 = vmatprep.subr.mxu0 0.0
    %1069 = vmatpush1.msra.mxu0 0.0
    %1070 = vmatprep.mubr.f32.mxu0 0.0
    %v1071 = vand.u32 %v88, 4294901760
    %1072 = vmatmul.mubr.f32.gmra.mrb[0].mxu0 %v1071
    %v1073 = vpop.f32.mrb[0].mxu0
    %v1074 = vadd.f32 %v991, %v1073
    %v1075 = vpop.f32.mrb[0].mxu0
    %1076 = vdwg.mxu0
    %1077 = vmatprep.subr.mxu0 0.0
    %v1078 = vand.u32 %v663, 4294901760
    %1079 = vmatpush1.msra.mxu0 %v1078
    %1080 = vmatprep.subr.mxu0 0.0
    %v1081 = vand.u32 %v664, 4294901760
    %1082 = vmatpush1.msra.mxu0 %v1081
    %1083 = vmatprep.subr.mxu0 0.0
    %v1084 = vand.u32 %v665, 4294901760
    %1085 = vmatpush1.msra.mxu0 %v1084
    %1086 = vmatprep.subr.mxu0 0.0
    %v1087 = vand.u32 %v666, 4294901760
    %1088 = vmatpush1.msra.mxu0 %v1087
    %1089 = vmatprep.subr.mxu0 0.0
    %1090 = vmatpush1.msra.mxu0 0.0
    %1091 = vmatprep.subr.mxu0 0.0
    %1092 = vmatpush1.msra.mxu0 0.0
    %1093 = vmatprep.subr.mxu0 0.0
    %1094 = vmatpush1.msra.mxu0 0.0
    %1095 = vmatprep.subr.mxu0 0.0
    %1096 = vmatpush1.msra.mxu0 0.0
    %1097 = vmatprep.subr.mxu0 0.0
    %1098 = vmatpush1.msra.mxu0 0.0
    %1099 = vmatprep.subr.mxu0 0.0
    %1100 = vmatpush1.msra.mxu0 0.0
    %1101 = vmatprep.subr.mxu0 0.0
    %1102 = vmatpush1.msra.mxu0 0.0
    %1103 = vmatprep.subr.mxu0 0.0
    %1104 = vmatpush1.msra.mxu0 0.0
    %1105 = vmatprep.subr.mxu0 0.0
    %1106 = vmatpush1.msra.mxu0 0.0
    %1107 = vmatprep.subr.mxu0 0.0
    %1108 = vmatpush1.msra.mxu0 0.0
    %1109 = vmatprep.subr.mxu0 0.0
    %1110 = vmatpush1.msra.mxu0 0.0
    %1111 = vmatprep.subr.mxu0 0.0
    %1112 = vmatpush1.msra.mxu0 0.0
    %1113 = vmatprep.subr.mxu0 0.0
    %1114 = vmatpush1.msra.mxu0 0.0
    %1115 = vmatprep.subr.mxu0 0.0
    %1116 = vmatpush1.msra.mxu0 0.0
    %1117 = vmatprep.subr.mxu0 0.0
    %1118 = vmatpush1.msra.mxu0 0.0
    %1119 = vmatprep.subr.mxu0 0.0
    %1120 = vmatpush1.msra.mxu0 0.0
    %1121 = vmatprep.subr.mxu0 0.0
    %1122 = vmatpush1.msra.mxu0 0.0
    %1123 = vmatprep.subr.mxu0 0.0
    %1124 = vmatpush1.msra.mxu0 0.0
    %1125 = vmatprep.subr.mxu0 0.0
    %1126 = vmatpush1.msra.mxu0 0.0
    %1127 = vmatprep.subr.mxu0 0.0
    %1128 = vmatpush1.msra.mxu0 0.0
    %1129 = vmatprep.subr.mxu0 0.0
    %1130 = vmatpush1.msra.mxu0 0.0
    %1131 = vmatprep.subr.mxu0 0.0
    %1132 = vmatpush1.msra.mxu0 0.0
    %1133 = vmatprep.subr.mxu0 0.0
    %1134 = vmatpush1.msra.mxu0 0.0
    %1135 = vmatprep.subr.mxu0 0.0
    %1136 = vmatpush1.msra.mxu0 0.0
    %1137 = vmatprep.subr.mxu0 0.0
    %1138 = vmatpush1.msra.mxu0 0.0
    %1139 = vmatprep.subr.mxu0 0.0
    %1140 = vmatpush1.msra.mxu0 0.0
    %1141 = vmatprep.subr.mxu0 0.0
    %1142 = vmatpush1.msra.mxu0 0.0
    %1143 = vmatprep.subr.mxu0 0.0
    %1144 = vmatpush1.msra.mxu0 0.0
    %1145 = vmatprep.mubr.f32.mxu0 0.0
    %v1146 = vand.u32 %v88, 4294901760
    %1147 = vmatmul.mubr.f32.gmra.mrb[0].mxu0 %v1146
    %v1148 = vpop.f32.mrb[0].mxu0
    %v1149 = vadd.f32 %v1074, %v1148
    %v1150 = vpop.f32.mrb[0].mxu0
    %1151 = vdwg.mxu0
    %vm1152 = vcmp.eq.f32.partialorder %v1149, 1.0
    %vm1153 = vmand %vm575, %vm1152
    %vm1154 = vmxor %vm1153, 1
    %vm1155 = vmand %vm648, %vm1154
    %vm1156 = vcmp.eq.f32.partialorder %v1149, 0.0
    %vm1157 = vmand %vm580, %vm1156
    %vm1158 = vmxor %vm1157, 1
    %vm1159 = vmand %vm1155, %vm1158
    %v1160 = vsub.f32 %v1149, %v55
    %v1161 = vmul.f32 %v1160, %v1160
    %v1162 = vadd.f32 %v1161, 1.0
    %v1164 = vrot.slane %v1161, 1
    %v1166 = vadd.f32 %v1162, %v1164
    %v1167 = vrot.slane %v1161, 2
    %v1169 = vadd.f32 %v1166, %v1167
    %v1170 = vrcp.pop %v1169
    %v1171 = vmul.f32 %v1169, %v1170
    %v1172 = vsub.f32 2.0, %v1171
    %v1173 = vmul.f32 %v1170, %v1172
    %v1174 = vsel %vm1159, 1, 0
    %v1175 = vcvt.s32.f32 %v1174
    %v1177 = vrot.slane %v1173, 1
    %v1179 = vmul.f32 %v1175, %v1177
    %v1180 = vmax.f32 %v1149, 0.0
    %v1181 = vadd.f32 %v606, %v1180
    %vm1182 = vcmp.eq.f32.partialorder %v1181, 0.0
    %v1183 = vsel %vm1182, %v611, 0.0
    %vm1184 = vcmp.eq.f32.partialorder %v1181, 1.0
    %v1185 = vsel %vm1184, %v615, %v1183
    %vm1186 = vcmp.eq.f32.partialorder %v1181, 2.0
    %v1187 = vsel %vm1186, %v619, %v1185
    %vm1188 = vcmp.eq.f32.partialorder %v1181, 3.0
    %v1189 = vsel %vm1188, %v623, %v1187
    %vm1190 = vcmp.eq.f32.partialorder %v1181, 4.0
    %v1191 = vsel %vm1190, %v627, %v1189
    %vm1192 = vcmp.eq.f32.partialorder %v1181, 5.0
    %v1193 = vsel %vm1192, %v631, %v1191
    %vm1194 = vcmp.eq.f32.partialorder %v1181, 6.0
    %v1195 = vsel %vm1194, %v635, %v1193
    %vm1196 = vcmp.eq.f32.partialorder %v1181, 7.0
    %v1197 = vsel %vm1196, %v639, %v1195
    %vm1198 = vcmp.eq.f32.partialorder %v1181, 8.0
    %v1199 = vsel %vm1198, %v643, %v1197
    %v1200 = vmul.f32 %v1199, %v1179
    %v1201 = vadd.f32 %v646, %v1200
    %v1202 = vld [vmem:[%s2 + $0x2] sm:$0x1]
    %vm1203 = vcmp.ge.s32.totalorder %v1202, 0
    %v1204 = vadd.s32 %v1202, %v60
    %v1205 = vsel %vm1203, %v1204, 4294967295
    %v1206 = vlaneseq
    %v1207 = vshrl.u32 %v1206, 7
    %v1208 = vsub.s32 0, %v1207
    %v1209 = vrot.slane %v1205, %v1208
    %vm1210 = vcmp.eq.s32.totalorder %v66, %v1209
    %vm1211 = vcmp.eq.s32.totalorder %v67, %v1209
    %vm1212 = vcmp.eq.s32.totalorder %v68, %v1209
    %vm1213 = vcmp.eq.s32.totalorder %v69, %v1209
    %v1214 = vsel %vm1210, 1, 0
    %v1215 = vsel %vm1211, 1, 0
    %v1216 = vsel %vm1212, 1, 0
    %v1217 = vsel %vm1213, 1, 0
    %v1218 = vcvt.s32.f32 %v1214
    %v1219 = vcvt.s32.f32 %v1215
    %v1220 = vcvt.s32.f32 %v1216
    %v1221 = vcvt.s32.f32 %v1217
    %1222 = vmatprep.subr.mxu0 0.0
    %v1223 = vand.u32 %v1218, 4294901760
    %1224 = vmatpush1.msra.mxu0 %v1223
    %1225 = vmatprep.subr.mxu0 0.0
    %v1226 = vand.u32 %v1219, 4294901760
    %1227 = vmatpush1.msra.mxu0 %v1226
    %1228 = vmatprep.subr.mxu0 0.0
    %v1229 = vand.u32 %v1220, 4294901760
    %1230 = vmatpush1.msra.mxu0 %v1229
    %1231 = vmatprep.subr.mxu0 0.0
    %v1232 = vand.u32 %v1221, 4294901760
    %1233 = vmatpush1.msra.mxu0 %v1232
    %1234 = vmatprep.subr.mxu0 0.0
    %1235 = vmatpush1.msra.mxu0 0.0
    %1236 = vmatprep.subr.mxu0 0.0
    %1237 = vmatpush1.msra.mxu0 0.0
    %1238 = vmatprep.subr.mxu0 0.0
    %1239 = vmatpush1.msra.mxu0 0.0
    %1240 = vmatprep.subr.mxu0 0.0
    %1241 = vmatpush1.msra.mxu0 0.0
    %1242 = vmatprep.subr.mxu0 0.0
    %1243 = vmatpush1.msra.mxu0 0.0
    %1244 = vmatprep.subr.mxu0 0.0
    %1245 = vmatpush1.msra.mxu0 0.0
    %1246 = vmatprep.subr.mxu0 0.0
    %1247 = vmatpush1.msra.mxu0 0.0
    %1248 = vmatprep.subr.mxu0 0.0
    %1249 = vmatpush1.msra.mxu0 0.0
    %1250 = vmatprep.subr.mxu0 0.0
    %1251 = vmatpush1.msra.mxu0 0.0
    %1252 = vmatprep.subr.mxu0 0.0
    %1253 = vmatpush1.msra.mxu0 0.0
    %1254 = vmatprep.subr.mxu0 0.0
    %1255 = vmatpush1.msra.mxu0 0.0
    %1256 = vmatprep.subr.mxu0 0.0
    %1257 = vmatpush1.msra.mxu0 0.0
    %1258 = vmatprep.subr.mxu0 0.0
    %1259 = vmatpush1.msra.mxu0 0.0
    %1260 = vmatprep.subr.mxu0 0.0
    %1261 = vmatpush1.msra.mxu0 0.0
    %1262 = vmatprep.subr.mxu0 0.0
    %1263 = vmatpush1.msra.mxu0 0.0
    %1264 = vmatprep.subr.mxu0 0.0
    %1265 = vmatpush1.msra.mxu0 0.0
    %1266 = vmatprep.subr.mxu0 0.0
    %1267 = vmatpush1.msra.mxu0 0.0
    %1268 = vmatprep.subr.mxu0 0.0
    %1269 = vmatpush1.msra.mxu0 0.0
    %1270 = vmatprep.subr.mxu0 0.0
    %1271 = vmatpush1.msra.mxu0 0.0
    %1272 = vmatprep.subr.mxu0 0.0
    %1273 = vmatpush1.msra.mxu0 0.0
    %1274 = vmatprep.subr.mxu0 0.0
    %1275 = vmatpush1.msra.mxu0 0.0
    %1276 = vmatprep.subr.mxu0 0.0
    %1277 = vmatpush1.msra.mxu0 0.0
    %1278 = vmatprep.subr.mxu0 0.0
    %1279 = vmatpush1.msra.mxu0 0.0
    %1280 = vmatprep.subr.mxu0 0.0
    %1281 = vmatpush1.msra.mxu0 0.0
    %1282 = vmatprep.subr.mxu0 0.0
    %1283 = vmatpush1.msra.mxu0 0.0
    %1284 = vmatprep.subr.mxu0 0.0
    %1285 = vmatpush1.msra.mxu0 0.0
    %1286 = vmatprep.subr.mxu0 0.0
    %1287 = vmatpush1.msra.mxu0 0.0
    %1288 = vmatprep.subr.mxu0 0.0
    %1289 = vmatpush1.msra.mxu0 0.0
    %1290 = vmatprep.mubr.f32.mxu0 0.0
    %v1291 = vand.u32 %v88, 4294901760
    %v1292 = vsub.f32 %v88, %v1291
    %v1293 = vand.u32 %v1292, 4294901760
    %v1294 = vsub.f32 %v1292, %v1293
    %v1295 = vand.u32 %v1294, 4294901760
    %1296 = vmatmul.mubr.f32.gmra.mrb[0].mxu0 %v1295
    %v1297 = vpop.f32.mrb[0].mxu0
    %v1298 = vadd.f32 0.0, %v1297
    %v1299 = vpop.f32.mrb[0].mxu0
    %1300 = vdwg.mxu0
    %1301 = vmatprep.subr.mxu0 0.0
    %v1302 = vand.u32 %v1218, 4294901760
    %v1303 = vsub.f32 %v1218, %v1302
    %v1304 = vand.u32 %v1303, 4294901760
    %v1305 = vsub.f32 %v1303, %v1304
    %v1306 = vand.u32 %v1305, 4294901760
    %1307 = vmatpush1.msra.mxu0 %v1306
    %1308 = vmatprep.subr.mxu0 0.0
    %v1309 = vand.u32 %v1219, 4294901760
    %v1310 = vsub.f32 %v1219, %v1309
    %v1311 = vand.u32 %v1310, 4294901760
    %v1312 = vsub.f32 %v1310, %v1311
    %v1313 = vand.u32 %v1312, 4294901760
    %1314 = vmatpush1.msra.mxu0 %v1313
    %1315 = vmatprep.subr.mxu0 0.0
    %v1316 = vand.u32 %v1220, 4294901760
    %v1317 = vsub.f32 %v1220, %v1316
    %v1318 = vand.u32 %v1317, 4294901760
    %v1319 = vsub.f32 %v1317, %v1318
    %v1320 = vand.u32 %v1319, 4294901760
    %1321 = vmatpush1.msra.mxu0 %v1320
    %1322 = vmatprep.subr.mxu0 0.0
    %v1323 = vand.u32 %v1221, 4294901760
    %v1324 = vsub.f32 %v1221, %v1323
    %v1325 = vand.u32 %v1324, 4294901760
    %v1326 = vsub.f32 %v1324, %v1325
    %v1327 = vand.u32 %v1326, 4294901760
    %1328 = vmatpush1.msra.mxu0 %v1327
    %1329 = vmatprep.subr.mxu0 0.0
    %1330 = vmatpush1.msra.mxu0 0.0
    %1331 = vmatprep.subr.mxu0 0.0
    %1332 = vmatpush1.msra.mxu0 0.0
    %1333 = vmatprep.subr.mxu0 0.0
    %1334 = vmatpush1.msra.mxu0 0.0
    %1335 = vmatprep.subr.mxu0 0.0
    %1336 = vmatpush1.msra.mxu0 0.0
    %1337 = vmatprep.subr.mxu0 0.0
    %1338 = vmatpush1.msra.mxu0 0.0
    %1339 = vmatprep.subr.mxu0 0.0
    %1340 = vmatpush1.msra.mxu0 0.0
    %1341 = vmatprep.subr.mxu0 0.0
    %1342 = vmatpush1.msra.mxu0 0.0
    %1343 = vmatprep.subr.mxu0 0.0
    %1344 = vmatpush1.msra.mxu0 0.0
    %1345 = vmatprep.subr.mxu0 0.0
    %1346 = vmatpush1.msra.mxu0 0.0
    %1347 = vmatprep.subr.mxu0 0.0
    %1348 = vmatpush1.msra.mxu0 0.0
    %1349 = vmatprep.subr.mxu0 0.0
    %1350 = vmatpush1.msra.mxu0 0.0
    %1351 = vmatprep.subr.mxu0 0.0
    %1352 = vmatpush1.msra.mxu0 0.0
    %1353 = vmatprep.subr.mxu0 0.0
    %1354 = vmatpush1.msra.mxu0 0.0
    %1355 = vmatprep.subr.mxu0 0.0
    %1356 = vmatpush1.msra.mxu0 0.0
    %1357 = vmatprep.subr.mxu0 0.0
    %1358 = vmatpush1.msra.mxu0 0.0
    %1359 = vmatprep.subr.mxu0 0.0
    %1360 = vmatpush1.msra.mxu0 0.0
    %1361 = vmatprep.subr.mxu0 0.0
    %1362 = vmatpush1.msra.mxu0 0.0
    %1363 = vmatprep.subr.mxu0 0.0
    %1364 = vmatpush1.msra.mxu0 0.0
    %1365 = vmatprep.subr.mxu0 0.0
    %1366 = vmatpush1.msra.mxu0 0.0
    %1367 = vmatprep.subr.mxu0 0.0
    %1368 = vmatpush1.msra.mxu0 0.0
    %1369 = vmatprep.subr.mxu0 0.0
    %1370 = vmatpush1.msra.mxu0 0.0
    %1371 = vmatprep.subr.mxu0 0.0
    %1372 = vmatpush1.msra.mxu0 0.0
    %1373 = vmatprep.subr.mxu0 0.0
    %1374 = vmatpush1.msra.mxu0 0.0
    %1375 = vmatprep.subr.mxu0 0.0
    %1376 = vmatpush1.msra.mxu0 0.0
    %1377 = vmatprep.subr.mxu0 0.0
    %1378 = vmatpush1.msra.mxu0 0.0
    %1379 = vmatprep.subr.mxu0 0.0
    %1380 = vmatpush1.msra.mxu0 0.0
    %1381 = vmatprep.subr.mxu0 0.0
    %1382 = vmatpush1.msra.mxu0 0.0
    %1383 = vmatprep.subr.mxu0 0.0
    %1384 = vmatpush1.msra.mxu0 0.0
    %1385 = vmatprep.mubr.f32.mxu0 0.0
    %v1386 = vand.u32 %v88, 4294901760
    %1387 = vmatmul.mubr.f32.gmra.mrb[0].mxu0 %v1386
    %v1388 = vpop.f32.mrb[0].mxu0
    %v1389 = vadd.f32 %v1298, %v1388
    %v1390 = vpop.f32.mrb[0].mxu0
    %1391 = vdwg.mxu0
    %1392 = vmatprep.subr.mxu0 0.0
    %v1393 = vand.u32 %v1218, 4294901760
    %v1394 = vsub.f32 %v1218, %v1393
    %1395 = vmatpush1.msra.mxu0 %v1394
    %1396 = vmatprep.subr.mxu0 0.0
    %v1397 = vand.u32 %v1219, 4294901760
    %v1398 = vsub.f32 %v1219, %v1397
    %1399 = vmatpush1.msra.mxu0 %v1398
    %1400 = vmatprep.subr.mxu0 0.0
    %v1401 = vand.u32 %v1220, 4294901760
    %v1402 = vsub.f32 %v1220, %v1401
    %1403 = vmatpush1.msra.mxu0 %v1402
    %1404 = vmatprep.subr.mxu0 0.0
    %v1405 = vand.u32 %v1221, 4294901760
    %v1406 = vsub.f32 %v1221, %v1405
    %1407 = vmatpush1.msra.mxu0 %v1406
    %1408 = vmatprep.subr.mxu0 0.0
    %1409 = vmatpush1.msra.mxu0 0.0
    %1410 = vmatprep.subr.mxu0 0.0
    %1411 = vmatpush1.msra.mxu0 0.0
    %1412 = vmatprep.subr.mxu0 0.0
    %1413 = vmatpush1.msra.mxu0 0.0
    %1414 = vmatprep.subr.mxu0 0.0
    %1415 = vmatpush1.msra.mxu0 0.0
    %1416 = vmatprep.subr.mxu0 0.0
    %1417 = vmatpush1.msra.mxu0 0.0
    %1418 = vmatprep.subr.mxu0 0.0
    %1419 = vmatpush1.msra.mxu0 0.0
    %1420 = vmatprep.subr.mxu0 0.0
    %1421 = vmatpush1.msra.mxu0 0.0
    %1422 = vmatprep.subr.mxu0 0.0
    %1423 = vmatpush1.msra.mxu0 0.0
    %1424 = vmatprep.subr.mxu0 0.0
    %1425 = vmatpush1.msra.mxu0 0.0
    %1426 = vmatprep.subr.mxu0 0.0
    %1427 = vmatpush1.msra.mxu0 0.0
    %1428 = vmatprep.subr.mxu0 0.0
    %1429 = vmatpush1.msra.mxu0 0.0
    %1430 = vmatprep.subr.mxu0 0.0
    %1431 = vmatpush1.msra.mxu0 0.0
    %1432 = vmatprep.subr.mxu0 0.0
    %1433 = vmatpush1.msra.mxu0 0.0
    %1434 = vmatprep.subr.mxu0 0.0
    %1435 = vmatpush1.msra.mxu0 0.0
    %1436 = vmatprep.subr.mxu0 0.0
    %1437 = vmatpush1.msra.mxu0 0.0
    %1438 = vmatprep.subr.mxu0 0.0
    %1439 = vmatpush1.msra.mxu0 0.0
    %1440 = vmatprep.subr.mxu0 0.0
    %1441 = vmatpush1.msra.mxu0 0.0
    %1442 = vmatprep.subr.mxu0 0.0
    %1443 = vmatpush1.msra.mxu0 0.0
    %1444 = vmatprep.subr.mxu0 0.0
    %1445 = vmatpush1.msra.mxu0 0.0
    %1446 = vmatprep.subr.mxu0 0.0
    %1447 = vmatpush1.msra.mxu0 0.0
    %1448 = vmatprep.subr.mxu0 0.0
    %1449 = vmatpush1.msra.mxu0 0.0
    %1450 = vmatprep.subr.mxu0 0.0
    %1451 = vmatpush1.msra.mxu0 0.0
    %1452 = vmatprep.subr.mxu0 0.0
    %1453 = vmatpush1.msra.mxu0 0.0
    %1454 = vmatprep.subr.mxu0 0.0
    %1455 = vmatpush1.msra.mxu0 0.0
    %1456 = vmatprep.subr.mxu0 0.0
    %1457 = vmatpush1.msra.mxu0 0.0
    %1458 = vmatprep.subr.mxu0 0.0
    %1459 = vmatpush1.msra.mxu0 0.0
    %1460 = vmatprep.subr.mxu0 0.0
    %1461 = vmatpush1.msra.mxu0 0.0
    %1462 = vmatprep.subr.mxu0 0.0
    %1463 = vmatpush1.msra.mxu0 0.0
    %1464 = vmatprep.mubr.f32.mxu0 0.0
    %v1465 = vand.u32 %v88, 4294901760
    %v1466 = vsub.f32 %v88, %v1465
    %1467 = vmatmul.mubr.f32.gmra.mrb[0].mxu0 %v1466
    %v1468 = vpop.f32.mrb[0].mxu0
    %v1469 = vadd.f32 %v1389, %v1468
    %v1470 = vpop.f32.mrb[0].mxu0
    %1471 = vdwg.mxu0
    %1472 = vmatprep.subr.mxu0 0.0
    %v1473 = vand.u32 %v1218, 4294901760
    %1474 = vmatpush1.msra.mxu0 %v1473
    %1475 = vmatprep.subr.mxu0 0.0
    %v1476 = vand.u32 %v1219, 4294901760
    %1477 = vmatpush1.msra.mxu0 %v1476
    %1478 = vmatprep.subr.mxu0 0.0
    %v1479 = vand.u32 %v1220, 4294901760
    %1480 = vmatpush1.msra.mxu0 %v1479
    %1481 = vmatprep.subr.mxu0 0.0
    %v1482 = vand.u32 %v1221, 4294901760
    %1483 = vmatpush1.msra.mxu0 %v1482
    %1484 = vmatprep.subr.mxu0 0.0
    %1485 = vmatpush1.msra.mxu0 0.0
    %1486 = vmatprep.subr.mxu0 0.0
    %1487 = vmatpush1.msra.mxu0 0.0
    %1488 = vmatprep.subr.mxu0 0.0
    %1489 = vmatpush1.msra.mxu0 0.0
    %1490 = vmatprep.subr.mxu0 0.0
    %1491 = vmatpush1.msra.mxu0 0.0
    %1492 = vmatprep.subr.mxu0 0.0
    %1493 = vmatpush1.msra.mxu0 0.0
    %1494 = vmatprep.subr.mxu0 0.0
    %1495 = vmatpush1.msra.mxu0 0.0
    %1496 = vmatprep.subr.mxu0 0.0
    %1497 = vmatpush1.msra.mxu0 0.0
    %1498 = vmatprep.subr.mxu0 0.0
    %1499 = vmatpush1.msra.mxu0 0.0
    %1500 = vmatprep.subr.mxu0 0.0
    %1501 = vmatpush1.msra.mxu0 0.0
    %1502 = vmatprep.subr.mxu0 0.0
    %1503 = vmatpush1.msra.mxu0 0.0
    %1504 = vmatprep.subr.mxu0 0.0
    %1505 = vmatpush1.msra.mxu0 0.0
    %1506 = vmatprep.subr.mxu0 0.0
    %1507 = vmatpush1.msra.mxu0 0.0
    %1508 = vmatprep.subr.mxu0 0.0
    %1509 = vmatpush1.msra.mxu0 0.0
    %1510 = vmatprep.subr.mxu0 0.0
    %1511 = vmatpush1.msra.mxu0 0.0
    %1512 = vmatprep.subr.mxu0 0.0
    %1513 = vmatpush1.msra.mxu0 0.0
    %1514 = vmatprep.subr.mxu0 0.0
    %1515 = vmatpush1.msra.mxu0 0.0
    %1516 = vmatprep.subr.mxu0 0.0
    %1517 = vmatpush1.msra.mxu0 0.0
    %1518 = vmatprep.subr.mxu0 0.0
    %1519 = vmatpush1.msra.mxu0 0.0
    %1520 = vmatprep.subr.mxu0 0.0
    %1521 = vmatpush1.msra.mxu0 0.0
    %1522 = vmatprep.subr.mxu0 0.0
    %1523 = vmatpush1.msra.mxu0 0.0
    %1524 = vmatprep.subr.mxu0 0.0
    %1525 = vmatpush1.msra.mxu0 0.0
    %1526 = vmatprep.subr.mxu0 0.0
    %1527 = vmatpush1.msra.mxu0 0.0
    %1528 = vmatprep.subr.mxu0 0.0
    %1529 = vmatpush1.msra.mxu0 0.0
    %1530 = vmatprep.subr.mxu0 0.0
    %1531 = vmatpush1.msra.mxu0 0.0
    %1532 = vmatprep.subr.mxu0 0.0
    %1533 = vmatpush1.msra.mxu0 0.0
    %1534 = vmatprep.subr.mxu0 0.0
    %1535 = vmatpush1.msra.mxu0 0.0
    %1536 = vmatprep.subr.mxu0 0.0
    %1537 = vmatpush1.msra.mxu0 0.0
    %1538 = vmatprep.subr.mxu0 0.0
    %1539 = vmatpush1.msra.mxu0 0.0
    %1540 = vmatprep.mubr.f32.mxu0 0.0
    %v1541 = vand.u32 %v88, 4294901760
    %v1542 = vsub.f32 %v88, %v1541
    %v1543 = vand.u32 %v1542, 4294901760
    %1544 = vmatmul.mubr.f32.gmra.mrb[0].mxu0 %v1543
    %v1545 = vpop.f32.mrb[0].mxu0
    %v1546 = vadd.f32 %v1469, %v1545
    %v1547 = vpop.f32.mrb[0].mxu0
    %1548 = vdwg.mxu0
    %1549 = vmatprep.subr.mxu0 0.0
    %v1550 = vand.u32 %v1218, 4294901760
    %v1551 = vsub.f32 %v1218, %v1550
    %v1552 = vand.u32 %v1551, 4294901760
    %1553 = vmatpush1.msra.mxu0 %v1552
    %1554 = vmatprep.subr.mxu0 0.0
    %v1555 = vand.u32 %v1219, 4294901760
    %v1556 = vsub.f32 %v1219, %v1555
    %v1557 = vand.u32 %v1556, 4294901760
    %1558 = vmatpush1.msra.mxu0 %v1557
    %1559 = vmatprep.subr.mxu0 0.0
    %v1560 = vand.u32 %v1220, 4294901760
    %v1561 = vsub.f32 %v1220, %v1560
    %v1562 = vand.u32 %v1561, 4294901760
    %1563 = vmatpush1.msra.mxu0 %v1562
    %1564 = vmatprep.subr.mxu0 0.0
    %v1565 = vand.u32 %v1221, 4294901760
    %v1566 = vsub.f32 %v1221, %v1565
    %v1567 = vand.u32 %v1566, 4294901760
    %1568 = vmatpush1.msra.mxu0 %v1567
    %1569 = vmatprep.subr.mxu0 0.0
    %1570 = vmatpush1.msra.mxu0 0.0
    %1571 = vmatprep.subr.mxu0 0.0
    %1572 = vmatpush1.msra.mxu0 0.0
    %1573 = vmatprep.subr.mxu0 0.0
    %1574 = vmatpush1.msra.mxu0 0.0
    %1575 = vmatprep.subr.mxu0 0.0
    %1576 = vmatpush1.msra.mxu0 0.0
    %1577 = vmatprep.subr.mxu0 0.0
    %1578 = vmatpush1.msra.mxu0 0.0
    %1579 = vmatprep.subr.mxu0 0.0
    %1580 = vmatpush1.msra.mxu0 0.0
    %1581 = vmatprep.subr.mxu0 0.0
    %1582 = vmatpush1.msra.mxu0 0.0
    %1583 = vmatprep.subr.mxu0 0.0
    %1584 = vmatpush1.msra.mxu0 0.0
    %1585 = vmatprep.subr.mxu0 0.0
    %1586 = vmatpush1.msra.mxu0 0.0
    %1587 = vmatprep.subr.mxu0 0.0
    %1588 = vmatpush1.msra.mxu0 0.0
    %1589 = vmatprep.subr.mxu0 0.0
    %1590 = vmatpush1.msra.mxu0 0.0
    %1591 = vmatprep.subr.mxu0 0.0
    %1592 = vmatpush1.msra.mxu0 0.0
    %1593 = vmatprep.subr.mxu0 0.0
    %1594 = vmatpush1.msra.mxu0 0.0
    %1595 = vmatprep.subr.mxu0 0.0
    %1596 = vmatpush1.msra.mxu0 0.0
    %1597 = vmatprep.subr.mxu0 0.0
    %1598 = vmatpush1.msra.mxu0 0.0
    %1599 = vmatprep.subr.mxu0 0.0
    %1600 = vmatpush1.msra.mxu0 0.0
    %1601 = vmatprep.subr.mxu0 0.0
    %1602 = vmatpush1.msra.mxu0 0.0
    %1603 = vmatprep.subr.mxu0 0.0
    %1604 = vmatpush1.msra.mxu0 0.0
    %1605 = vmatprep.subr.mxu0 0.0
    %1606 = vmatpush1.msra.mxu0 0.0
    %1607 = vmatprep.subr.mxu0 0.0
    %1608 = vmatpush1.msra.mxu0 0.0
    %1609 = vmatprep.subr.mxu0 0.0
    %1610 = vmatpush1.msra.mxu0 0.0
    %1611 = vmatprep.subr.mxu0 0.0
    %1612 = vmatpush1.msra.mxu0 0.0
    %1613 = vmatprep.subr.mxu0 0.0
    %1614 = vmatpush1.msra.mxu0 0.0
    %1615 = vmatprep.subr.mxu0 0.0
    %1616 = vmatpush1.msra.mxu0 0.0
    %1617 = vmatprep.subr.mxu0 0.0
    %1618 = vmatpush1.msra.mxu0 0.0
    %1619 = vmatprep.subr.mxu0 0.0
    %1620 = vmatpush1.msra.mxu0 0.0
    %1621 = vmatprep.subr.mxu0 0.0
    %1622 = vmatpush1.msra.mxu0 0.0
    %1623 = vmatprep.subr.mxu0 0.0
    %1624 = vmatpush1.msra.mxu0 0.0
    %1625 = vmatprep.mubr.f32.mxu0 0.0
    %v1626 = vand.u32 %v88, 4294901760
    %1627 = vmatmul.mubr.f32.gmra.mrb[0].mxu0 %v1626
    %v1628 = vpop.f32.mrb[0].mxu0
    %v1629 = vadd.f32 %v1546, %v1628
    %v1630 = vpop.f32.mrb[0].mxu0
    %1631 = vdwg.mxu0
    %1632 = vmatprep.subr.mxu0 0.0
    %v1633 = vand.u32 %v1218, 4294901760
    %1634 = vmatpush1.msra.mxu0 %v1633
    %1635 = vmatprep.subr.mxu0 0.0
    %v1636 = vand.u32 %v1219, 4294901760
    %1637 = vmatpush1.msra.mxu0 %v1636
    %1638 = vmatprep.subr.mxu0 0.0
    %v1639 = vand.u32 %v1220, 4294901760
    %1640 = vmatpush1.msra.mxu0 %v1639
    %1641 = vmatprep.subr.mxu0 0.0
    %v1642 = vand.u32 %v1221, 4294901760
    %1643 = vmatpush1.msra.mxu0 %v1642
    %1644 = vmatprep.subr.mxu0 0.0
    %1645 = vmatpush1.msra.mxu0 0.0
    %1646 = vmatprep.subr.mxu0 0.0
    %1647 = vmatpush1.msra.mxu0 0.0
    %1648 = vmatprep.subr.mxu0 0.0
    %1649 = vmatpush1.msra.mxu0 0.0
    %1650 = vmatprep.subr.mxu0 0.0
    %1651 = vmatpush1.msra.mxu0 0.0
    %1652 = vmatprep.subr.mxu0 0.0
    %1653 = vmatpush1.msra.mxu0 0.0
    %1654 = vmatprep.subr.mxu0 0.0
    %1655 = vmatpush1.msra.mxu0 0.0
    %1656 = vmatprep.subr.mxu0 0.0
    %1657 = vmatpush1.msra.mxu0 0.0
    %1658 = vmatprep.subr.mxu0 0.0
    %1659 = vmatpush1.msra.mxu0 0.0
    %1660 = vmatprep.subr.mxu0 0.0
    %1661 = vmatpush1.msra.mxu0 0.0
    %1662 = vmatprep.subr.mxu0 0.0
    %1663 = vmatpush1.msra.mxu0 0.0
    %1664 = vmatprep.subr.mxu0 0.0
    %1665 = vmatpush1.msra.mxu0 0.0
    %1666 = vmatprep.subr.mxu0 0.0
    %1667 = vmatpush1.msra.mxu0 0.0
    %1668 = vmatprep.subr.mxu0 0.0
    %1669 = vmatpush1.msra.mxu0 0.0
    %1670 = vmatprep.subr.mxu0 0.0
    %1671 = vmatpush1.msra.mxu0 0.0
    %1672 = vmatprep.subr.mxu0 0.0
    %1673 = vmatpush1.msra.mxu0 0.0
    %1674 = vmatprep.subr.mxu0 0.0
    %1675 = vmatpush1.msra.mxu0 0.0
    %1676 = vmatprep.subr.mxu0 0.0
    %1677 = vmatpush1.msra.mxu0 0.0
    %1678 = vmatprep.subr.mxu0 0.0
    %1679 = vmatpush1.msra.mxu0 0.0
    %1680 = vmatprep.subr.mxu0 0.0
    %1681 = vmatpush1.msra.mxu0 0.0
    %1682 = vmatprep.subr.mxu0 0.0
    %1683 = vmatpush1.msra.mxu0 0.0
    %1684 = vmatprep.subr.mxu0 0.0
    %1685 = vmatpush1.msra.mxu0 0.0
    %1686 = vmatprep.subr.mxu0 0.0
    %1687 = vmatpush1.msra.mxu0 0.0
    %1688 = vmatprep.subr.mxu0 0.0
    %1689 = vmatpush1.msra.mxu0 0.0
    %1690 = vmatprep.subr.mxu0 0.0
    %1691 = vmatpush1.msra.mxu0 0.0
    %1692 = vmatprep.subr.mxu0 0.0
    %1693 = vmatpush1.msra.mxu0 0.0
    %1694 = vmatprep.subr.mxu0 0.0
    %1695 = vmatpush1.msra.mxu0 0.0
    %1696 = vmatprep.subr.mxu0 0.0
    %1697 = vmatpush1.msra.mxu0 0.0
    %1698 = vmatprep.subr.mxu0 0.0
    %1699 = vmatpush1.msra.mxu0 0.0
    %1700 = vmatprep.mubr.f32.mxu0 0.0
    %v1701 = vand.u32 %v88, 4294901760
    %1702 = vmatmul.mubr.f32.gmra.mrb[0].mxu0 %v1701
    %v1703 = vpop.f32.mrb[0].mxu0
    %v1704 = vadd.f32 %v1629, %v1703
    %v1705 = vpop.f32.mrb[0].mxu0
    %1706 = vdwg.mxu0
    %vm1707 = vcmp.eq.f32.partialorder %v1704, 1.0
    %vm1708 = vmand %vm575, %vm1707
    %vm1709 = vmxor %vm1708, 1
    %vm1710 = vmand %vm1203, %vm1709
    %vm1711 = vcmp.eq.f32.partialorder %v1704, 0.0
    %vm1712 = vmand %vm580, %vm1711
    %vm1713 = vmxor %vm1712, 1
    %vm1714 = vmand %vm1710, %vm1713
    %v1715 = vsub.f32 %v1704, %v55
    %v1716 = vmul.f32 %v1715, %v1715
    %v1717 = vadd.f32 %v1716, 1.0
    %v1719 = vrot.slane %v1716, 1
    %v1721 = vadd.f32 %v1717, %v1719
    %v1722 = vrot.slane %v1716, 2
    %v1724 = vadd.f32 %v1721, %v1722
    %v1725 = vrcp.pop %v1724
    %v1726 = vmul.f32 %v1724, %v1725
    %v1727 = vsub.f32 2.0, %v1726
    %v1728 = vmul.f32 %v1725, %v1727
    %v1729 = vsel %vm1714, 1, 0
    %v1730 = vcvt.s32.f32 %v1729
    %v1732 = vrot.slane %v1728, 1
    %v1734 = vmul.f32 %v1730, %v1732
    %v1735 = vmax.f32 %v1704, 0.0
    %v1736 = vadd.f32 %v606, %v1735
    %vm1737 = vcmp.eq.f32.partialorder %v1736, 0.0
    %v1738 = vsel %vm1737, %v611, 0.0
    %vm1739 = vcmp.eq.f32.partialorder %v1736, 1.0
    %v1740 = vsel %vm1739, %v615, %v1738
    %vm1741 = vcmp.eq.f32.partialorder %v1736, 2.0
    %v1742 = vsel %vm1741, %v619, %v1740
    %vm1743 = vcmp.eq.f32.partialorder %v1736, 3.0
    %v1744 = vsel %vm1743, %v623, %v1742
    %vm1745 = vcmp.eq.f32.partialorder %v1736, 4.0
    %v1746 = vsel %vm1745, %v627, %v1744
    %vm1747 = vcmp.eq.f32.partialorder %v1736, 5.0
    %v1748 = vsel %vm1747, %v631, %v1746
    %vm1749 = vcmp.eq.f32.partialorder %v1736, 6.0
    %v1750 = vsel %vm1749, %v635, %v1748
    %vm1751 = vcmp.eq.f32.partialorder %v1736, 7.0
    %v1752 = vsel %vm1751, %v639, %v1750
    %vm1753 = vcmp.eq.f32.partialorder %v1736, 8.0
    %v1754 = vsel %vm1753, %v643, %v1752
    %v1755 = vmul.f32 %v1754, %v1734
    %v1756 = vadd.f32 %v1201, %v1755
    %v1757 = vld [vmem:[%s2 + $0x3] sm:$0x1]
    %vm1758 = vcmp.ge.s32.totalorder %v1757, 0
    %v1759 = vadd.s32 %v1757, %v60
    %v1760 = vsel %vm1758, %v1759, 4294967295
    %v1761 = vlaneseq
    %v1762 = vshrl.u32 %v1761, 7
    %v1763 = vsub.s32 0, %v1762
    %v1764 = vrot.slane %v1760, %v1763
    %vm1765 = vcmp.eq.s32.totalorder %v66, %v1764
    %vm1766 = vcmp.eq.s32.totalorder %v67, %v1764
    %vm1767 = vcmp.eq.s32.totalorder %v68, %v1764
    %vm1768 = vcmp.eq.s32.totalorder %v69, %v1764
    %v1769 = vsel %vm1765, 1, 0
    %v1770 = vsel %vm1766, 1, 0
    %v1771 = vsel %vm1767, 1, 0
    %v1772 = vsel %vm1768, 1, 0
    %v1773 = vcvt.s32.f32 %v1769
    %v1774 = vcvt.s32.f32 %v1770
    %v1775 = vcvt.s32.f32 %v1771
    %v1776 = vcvt.s32.f32 %v1772
    %1777 = vmatprep.subr.mxu0 0.0
    %v1778 = vand.u32 %v1773, 4294901760
    %1779 = vmatpush1.msra.mxu0 %v1778
    %1780 = vmatprep.subr.mxu0 0.0
    %v1781 = vand.u32 %v1774, 4294901760
    %1782 = vmatpush1.msra.mxu0 %v1781
    %1783 = vmatprep.subr.mxu0 0.0
    %v1784 = vand.u32 %v1775, 4294901760
    %1785 = vmatpush1.msra.mxu0 %v1784
    %1786 = vmatprep.subr.mxu0 0.0
    %v1787 = vand.u32 %v1776, 4294901760
    %1788 = vmatpush1.msra.mxu0 %v1787
    %1789 = vmatprep.subr.mxu0 0.0
    %1790 = vmatpush1.msra.mxu0 0.0
    %1791 = vmatprep.subr.mxu0 0.0
    %1792 = vmatpush1.msra.mxu0 0.0
    %1793 = vmatprep.subr.mxu0 0.0
    %1794 = vmatpush1.msra.mxu0 0.0
    %1795 = vmatprep.subr.mxu0 0.0
    %1796 = vmatpush1.msra.mxu0 0.0
    %1797 = vmatprep.subr.mxu0 0.0
    %1798 = vmatpush1.msra.mxu0 0.0
    %1799 = vmatprep.subr.mxu0 0.0
    %1800 = vmatpush1.msra.mxu0 0.0
    %1801 = vmatprep.subr.mxu0 0.0
    %1802 = vmatpush1.msra.mxu0 0.0
    %1803 = vmatprep.subr.mxu0 0.0
    %1804 = vmatpush1.msra.mxu0 0.0
    %1805 = vmatprep.subr.mxu0 0.0
    %1806 = vmatpush1.msra.mxu0 0.0
    %1807 = vmatprep.subr.mxu0 0.0
    %1808 = vmatpush1.msra.mxu0 0.0
    %1809 = vmatprep.subr.mxu0 0.0
    %1810 = vmatpush1.msra.mxu0 0.0
    %1811 = vmatprep.subr.mxu0 0.0
    %1812 = vmatpush1.msra.mxu0 0.0
    %1813 = vmatprep.subr.mxu0 0.0
    %1814 = vmatpush1.msra.mxu0 0.0
    %1815 = vmatprep.subr.mxu0 0.0
    %1816 = vmatpush1.msra.mxu0 0.0
    %1817 = vmatprep.subr.mxu0 0.0
    %1818 = vmatpush1.msra.mxu0 0.0
    %1819 = vmatprep.subr.mxu0 0.0
    %1820 = vmatpush1.msra.mxu0 0.0
    %1821 = vmatprep.subr.mxu0 0.0
    %1822 = vmatpush1.msra.mxu0 0.0
    %1823 = vmatprep.subr.mxu0 0.0
    %1824 = vmatpush1.msra.mxu0 0.0
    %1825 = vmatprep.subr.mxu0 0.0
    %1826 = vmatpush1.msra.mxu0 0.0
    %1827 = vmatprep.subr.mxu0 0.0
    %1828 = vmatpush1.msra.mxu0 0.0
    %1829 = vmatprep.subr.mxu0 0.0
    %1830 = vmatpush1.msra.mxu0 0.0
    %1831 = vmatprep.subr.mxu0 0.0
    %1832 = vmatpush1.msra.mxu0 0.0
    %1833 = vmatprep.subr.mxu0 0.0
    %1834 = vmatpush1.msra.mxu0 0.0
    %1835 = vmatprep.subr.mxu0 0.0
    %1836 = vmatpush1.msra.mxu0 0.0
    %1837 = vmatprep.subr.mxu0 0.0
    %1838 = vmatpush1.msra.mxu0 0.0
    %1839 = vmatprep.subr.mxu0 0.0
    %1840 = vmatpush1.msra.mxu0 0.0
    %1841 = vmatprep.subr.mxu0 0.0
    %1842 = vmatpush1.msra.mxu0 0.0
    %1843 = vmatprep.subr.mxu0 0.0
    %1844 = vmatpush1.msra.mxu0 0.0
    %1845 = vmatprep.mubr.f32.mxu0 0.0
    %v1846 = vand.u32 %v88, 4294901760
    %v1847 = vsub.f32 %v88, %v1846
    %v1848 = vand.u32 %v1847, 4294901760
    %v1849 = vsub.f32 %v1847, %v1848
    %v1850 = vand.u32 %v1849, 4294901760
    %1851 = vmatmul.mubr.f32.gmra.mrb[0].mxu0 %v1850
    %v1852 = vpop.f32.mrb[0].mxu0
    %v1853 = vadd.f32 0.0, %v1852
    %v1854 = vpop.f32.mrb[0].mxu0
    %1855 = vdwg.mxu0
    %1856 = vmatprep.subr.mxu0 0.0
    %v1857 = vand.u32 %v1773, 4294901760
    %v1858 = vsub.f32 %v1773, %v1857
    %v1859 = vand.u32 %v1858, 4294901760
    %v1860 = vsub.f32 %v1858, %v1859
    %v1861 = vand.u32 %v1860, 4294901760
    %1862 = vmatpush1.msra.mxu0 %v1861
    %1863 = vmatprep.subr.mxu0 0.0
    %v1864 = vand.u32 %v1774, 4294901760
    %v1865 = vsub.f32 %v1774, %v1864
    %v1866 = vand.u32 %v1865, 4294901760
    %v1867 = vsub.f32 %v1865, %v1866
    %v1868 = vand.u32 %v1867, 4294901760
    %1869 = vmatpush1.msra.mxu0 %v1868
    %1870 = vmatprep.subr.mxu0 0.0
    %v1871 = vand.u32 %v1775, 4294901760
    %v1872 = vsub.f32 %v1775, %v1871
    %v1873 = vand.u32 %v1872, 4294901760
    %v1874 = vsub.f32 %v1872, %v1873
    %v1875 = vand.u32 %v1874, 4294901760
    %1876 = vmatpush1.msra.mxu0 %v1875
    %1877 = vmatprep.subr.mxu0 0.0
    %v1878 = vand.u32 %v1776, 4294901760
    %v1879 = vsub.f32 %v1776, %v1878
    %v1880 = vand.u32 %v1879, 4294901760
    %v1881 = vsub.f32 %v1879, %v1880
    %v1882 = vand.u32 %v1881, 4294901760
    %1883 = vmatpush1.msra.mxu0 %v1882
    %1884 = vmatprep.subr.mxu0 0.0
    %1885 = vmatpush1.msra.mxu0 0.0
    %1886 = vmatprep.subr.mxu0 0.0
    %1887 = vmatpush1.msra.mxu0 0.0
    %1888 = vmatprep.subr.mxu0 0.0
    %1889 = vmatpush1.msra.mxu0 0.0
    %1890 = vmatprep.subr.mxu0 0.0
    %1891 = vmatpush1.msra.mxu0 0.0
    %1892 = vmatprep.subr.mxu0 0.0
    %1893 = vmatpush1.msra.mxu0 0.0
    %1894 = vmatprep.subr.mxu0 0.0
    %1895 = vmatpush1.msra.mxu0 0.0
    %1896 = vmatprep.subr.mxu0 0.0
    %1897 = vmatpush1.msra.mxu0 0.0
    %1898 = vmatprep.subr.mxu0 0.0
    %1899 = vmatpush1.msra.mxu0 0.0
    %1900 = vmatprep.subr.mxu0 0.0
    %1901 = vmatpush1.msra.mxu0 0.0
    %1902 = vmatprep.subr.mxu0 0.0
    %1903 = vmatpush1.msra.mxu0 0.0
    %1904 = vmatprep.subr.mxu0 0.0
    %1905 = vmatpush1.msra.mxu0 0.0
    %1906 = vmatprep.subr.mxu0 0.0
    %1907 = vmatpush1.msra.mxu0 0.0
    %1908 = vmatprep.subr.mxu0 0.0
    %1909 = vmatpush1.msra.mxu0 0.0
    %1910 = vmatprep.subr.mxu0 0.0
    %1911 = vmatpush1.msra.mxu0 0.0
    %1912 = vmatprep.subr.mxu0 0.0
    %1913 = vmatpush1.msra.mxu0 0.0
    %1914 = vmatprep.subr.mxu0 0.0
    %1915 = vmatpush1.msra.mxu0 0.0
    %1916 = vmatprep.subr.mxu0 0.0
    %1917 = vmatpush1.msra.mxu0 0.0
    %1918 = vmatprep.subr.mxu0 0.0
    %1919 = vmatpush1.msra.mxu0 0.0
    %1920 = vmatprep.subr.mxu0 0.0
    %1921 = vmatpush1.msra.mxu0 0.0
    %1922 = vmatprep.subr.mxu0 0.0
    %1923 = vmatpush1.msra.mxu0 0.0
    %1924 = vmatprep.subr.mxu0 0.0
    %1925 = vmatpush1.msra.mxu0 0.0
    %1926 = vmatprep.subr.mxu0 0.0
    %1927 = vmatpush1.msra.mxu0 0.0
    %1928 = vmatprep.subr.mxu0 0.0
    %1929 = vmatpush1.msra.mxu0 0.0
    %1930 = vmatprep.subr.mxu0 0.0
    %1931 = vmatpush1.msra.mxu0 0.0
    %1932 = vmatprep.subr.mxu0 0.0
    %1933 = vmatpush1.msra.mxu0 0.0
    %1934 = vmatprep.subr.mxu0 0.0
    %1935 = vmatpush1.msra.mxu0 0.0
    %1936 = vmatprep.subr.mxu0 0.0
    %1937 = vmatpush1.msra.mxu0 0.0
    %1938 = vmatprep.subr.mxu0 0.0
    %1939 = vmatpush1.msra.mxu0 0.0
    %1940 = vmatprep.mubr.f32.mxu0 0.0
    %v1941 = vand.u32 %v88, 4294901760
    %1942 = vmatmul.mubr.f32.gmra.mrb[0].mxu0 %v1941
    %v1943 = vpop.f32.mrb[0].mxu0
    %v1944 = vadd.f32 %v1853, %v1943
    %v1945 = vpop.f32.mrb[0].mxu0
    %1946 = vdwg.mxu0
    %1947 = vmatprep.subr.mxu0 0.0
    %v1948 = vand.u32 %v1773, 4294901760
    %v1949 = vsub.f32 %v1773, %v1948
    %1950 = vmatpush1.msra.mxu0 %v1949
    %1951 = vmatprep.subr.mxu0 0.0
    %v1952 = vand.u32 %v1774, 4294901760
    %v1953 = vsub.f32 %v1774, %v1952
    %1954 = vmatpush1.msra.mxu0 %v1953
    %1955 = vmatprep.subr.mxu0 0.0
    %v1956 = vand.u32 %v1775, 4294901760
    %v1957 = vsub.f32 %v1775, %v1956
    %1958 = vmatpush1.msra.mxu0 %v1957
    %1959 = vmatprep.subr.mxu0 0.0
    %v1960 = vand.u32 %v1776, 4294901760
    %v1961 = vsub.f32 %v1776, %v1960
    %1962 = vmatpush1.msra.mxu0 %v1961
    %1963 = vmatprep.subr.mxu0 0.0
    %1964 = vmatpush1.msra.mxu0 0.0
    %1965 = vmatprep.subr.mxu0 0.0
    %1966 = vmatpush1.msra.mxu0 0.0
    %1967 = vmatprep.subr.mxu0 0.0
    %1968 = vmatpush1.msra.mxu0 0.0
    %1969 = vmatprep.subr.mxu0 0.0
    %1970 = vmatpush1.msra.mxu0 0.0
    %1971 = vmatprep.subr.mxu0 0.0
    %1972 = vmatpush1.msra.mxu0 0.0
    %1973 = vmatprep.subr.mxu0 0.0
    %1974 = vmatpush1.msra.mxu0 0.0
    %1975 = vmatprep.subr.mxu0 0.0
    %1976 = vmatpush1.msra.mxu0 0.0
    %1977 = vmatprep.subr.mxu0 0.0
    %1978 = vmatpush1.msra.mxu0 0.0
    %1979 = vmatprep.subr.mxu0 0.0
    %1980 = vmatpush1.msra.mxu0 0.0
    %1981 = vmatprep.subr.mxu0 0.0
    %1982 = vmatpush1.msra.mxu0 0.0
    %1983 = vmatprep.subr.mxu0 0.0
    %1984 = vmatpush1.msra.mxu0 0.0
    %1985 = vmatprep.subr.mxu0 0.0
    %1986 = vmatpush1.msra.mxu0 0.0
    %1987 = vmatprep.subr.mxu0 0.0
    %1988 = vmatpush1.msra.mxu0 0.0
    %1989 = vmatprep.subr.mxu0 0.0
    %1990 = vmatpush1.msra.mxu0 0.0
    %1991 = vmatprep.subr.mxu0 0.0
    %1992 = vmatpush1.msra.mxu0 0.0
    %1993 = vmatprep.subr.mxu0 0.0
    %1994 = vmatpush1.msra.mxu0 0.0
    %1995 = vmatprep.subr.mxu0 0.0
    %1996 = vmatpush1.msra.mxu0 0.0
    %1997 = vmatprep.subr.mxu0 0.0
    %1998 = vmatpush1.msra.mxu0 0.0
    %1999 = vmatprep.subr.mxu0 0.0
    %2000 = vmatpush1.msra.mxu0 0.0
    %2001 = vmatprep.subr.mxu0 0.0
    %2002 = vmatpush1.msra.mxu0 0.0
    %2003 = vmatprep.subr.mxu0 0.0
    %2004 = vmatpush1.msra.mxu0 0.0
    %2005 = vmatprep.subr.mxu0 0.0
    %2006 = vmatpush1.msra.mxu0 0.0
    %2007 = vmatprep.subr.mxu0 0.0
    %2008 = vmatpush1.msra.mxu0 0.0
    %2009 = vmatprep.subr.mxu0 0.0
    %2010 = vmatpush1.msra.mxu0 0.0
    %2011 = vmatprep.subr.mxu0 0.0
    %2012 = vmatpush1.msra.mxu0 0.0
    %2013 = vmatprep.subr.mxu0 0.0
    %2014 = vmatpush1.msra.mxu0 0.0
    %2015 = vmatprep.subr.mxu0 0.0
    %2016 = vmatpush1.msra.mxu0 0.0
    %2017 = vmatprep.subr.mxu0 0.0
    %2018 = vmatpush1.msra.mxu0 0.0
    %2019 = vmatprep.mubr.f32.mxu0 0.0
    %v2020 = vand.u32 %v88, 4294901760
    %v2021 = vsub.f32 %v88, %v2020
    %2022 = vmatmul.mubr.f32.gmra.mrb[0].mxu0 %v2021
    %v2023 = vpop.f32.mrb[0].mxu0
    %v2024 = vadd.f32 %v1944, %v2023
    %v2025 = vpop.f32.mrb[0].mxu0
    %2026 = vdwg.mxu0
    %2027 = vmatprep.subr.mxu0 0.0
    %v2028 = vand.u32 %v1773, 4294901760
    %2029 = vmatpush1.msra.mxu0 %v2028
    %2030 = vmatprep.subr.mxu0 0.0
    %v2031 = vand.u32 %v1774, 4294901760
    %2032 = vmatpush1.msra.mxu0 %v2031
    %2033 = vmatprep.subr.mxu0 0.0
    %v2034 = vand.u32 %v1775, 4294901760
    %2035 = vmatpush1.msra.mxu0 %v2034
    %2036 = vmatprep.subr.mxu0 0.0
    %v2037 = vand.u32 %v1776, 4294901760
    %2038 = vmatpush1.msra.mxu0 %v2037
    %2039 = vmatprep.subr.mxu0 0.0
    %2040 = vmatpush1.msra.mxu0 0.0
    %2041 = vmatprep.subr.mxu0 0.0
    %2042 = vmatpush1.msra.mxu0 0.0
    %2043 = vmatprep.subr.mxu0 0.0
    %2044 = vmatpush1.msra.mxu0 0.0
    %2045 = vmatprep.subr.mxu0 0.0
    %2046 = vmatpush1.msra.mxu0 0.0
    %2047 = vmatprep.subr.mxu0 0.0
    %2048 = vmatpush1.msra.mxu0 0.0
    %2049 = vmatprep.subr.mxu0 0.0
    %2050 = vmatpush1.msra.mxu0 0.0
    %2051 = vmatprep.subr.mxu0 0.0
    %2052 = vmatpush1.msra.mxu0 0.0
    %2053 = vmatprep.subr.mxu0 0.0
    %2054 = vmatpush1.msra.mxu0 0.0
    %2055 = vmatprep.subr.mxu0 0.0
    %2056 = vmatpush1.msra.mxu0 0.0
    %2057 = vmatprep.subr.mxu0 0.0
    %2058 = vmatpush1.msra.mxu0 0.0
    %2059 = vmatprep.subr.mxu0 0.0
    %2060 = vmatpush1.msra.mxu0 0.0
    %2061 = vmatprep.subr.mxu0 0.0
    %2062 = vmatpush1.msra.mxu0 0.0
    %2063 = vmatprep.subr.mxu0 0.0
    %2064 = vmatpush1.msra.mxu0 0.0
    %2065 = vmatprep.subr.mxu0 0.0
    %2066 = vmatpush1.msra.mxu0 0.0
    %2067 = vmatprep.subr.mxu0 0.0
    %2068 = vmatpush1.msra.mxu0 0.0
    %2069 = vmatprep.subr.mxu0 0.0
    %2070 = vmatpush1.msra.mxu0 0.0
    %2071 = vmatprep.subr.mxu0 0.0
    %2072 = vmatpush1.msra.mxu0 0.0
    %2073 = vmatprep.subr.mxu0 0.0
    %2074 = vmatpush1.msra.mxu0 0.0
    %2075 = vmatprep.subr.mxu0 0.0
    %2076 = vmatpush1.msra.mxu0 0.0
    %2077 = vmatprep.subr.mxu0 0.0
    %2078 = vmatpush1.msra.mxu0 0.0
    %2079 = vmatprep.subr.mxu0 0.0
    %2080 = vmatpush1.msra.mxu0 0.0
    %2081 = vmatprep.subr.mxu0 0.0
    %2082 = vmatpush1.msra.mxu0 0.0
    %2083 = vmatprep.subr.mxu0 0.0
    %2084 = vmatpush1.msra.mxu0 0.0
    %2085 = vmatprep.subr.mxu0 0.0
    %2086 = vmatpush1.msra.mxu0 0.0
    %2087 = vmatprep.subr.mxu0 0.0
    %2088 = vmatpush1.msra.mxu0 0.0
    %2089 = vmatprep.subr.mxu0 0.0
    %2090 = vmatpush1.msra.mxu0 0.0
    %2091 = vmatprep.subr.mxu0 0.0
    %2092 = vmatpush1.msra.mxu0 0.0
    %2093 = vmatprep.subr.mxu0 0.0
    %2094 = vmatpush1.msra.mxu0 0.0
    %2095 = vmatprep.mubr.f32.mxu0 0.0
    %v2096 = vand.u32 %v88, 4294901760
    %v2097 = vsub.f32 %v88, %v2096
    %v2098 = vand.u32 %v2097, 4294901760
    %2099 = vmatmul.mubr.f32.gmra.mrb[0].mxu0 %v2098
    %v2100 = vpop.f32.mrb[0].mxu0
    %v2101 = vadd.f32 %v2024, %v2100
    %v2102 = vpop.f32.mrb[0].mxu0
    %2103 = vdwg.mxu0
    %2104 = vmatprep.subr.mxu0 0.0
    %v2105 = vand.u32 %v1773, 4294901760
    %v2106 = vsub.f32 %v1773, %v2105
    %v2107 = vand.u32 %v2106, 4294901760
    %2108 = vmatpush1.msra.mxu0 %v2107
    %2109 = vmatprep.subr.mxu0 0.0
    %v2110 = vand.u32 %v1774, 4294901760
    %v2111 = vsub.f32 %v1774, %v2110
    %v2112 = vand.u32 %v2111, 4294901760
    %2113 = vmatpush1.msra.mxu0 %v2112
    %2114 = vmatprep.subr.mxu0 0.0
    %v2115 = vand.u32 %v1775, 4294901760
    %v2116 = vsub.f32 %v1775, %v2115
    %v2117 = vand.u32 %v2116, 4294901760
    %2118 = vmatpush1.msra.mxu0 %v2117
    %2119 = vmatprep.subr.mxu0 0.0
    %v2120 = vand.u32 %v1776, 4294901760
    %v2121 = vsub.f32 %v1776, %v2120
    %v2122 = vand.u32 %v2121, 4294901760
    %2123 = vmatpush1.msra.mxu0 %v2122
    %2124 = vmatprep.subr.mxu0 0.0
    %2125 = vmatpush1.msra.mxu0 0.0
    %2126 = vmatprep.subr.mxu0 0.0
    %2127 = vmatpush1.msra.mxu0 0.0
    %2128 = vmatprep.subr.mxu0 0.0
    %2129 = vmatpush1.msra.mxu0 0.0
    %2130 = vmatprep.subr.mxu0 0.0
    %2131 = vmatpush1.msra.mxu0 0.0
    %2132 = vmatprep.subr.mxu0 0.0
    %2133 = vmatpush1.msra.mxu0 0.0
    %2134 = vmatprep.subr.mxu0 0.0
    %2135 = vmatpush1.msra.mxu0 0.0
    %2136 = vmatprep.subr.mxu0 0.0
    %2137 = vmatpush1.msra.mxu0 0.0
    %2138 = vmatprep.subr.mxu0 0.0
    %2139 = vmatpush1.msra.mxu0 0.0
    %2140 = vmatprep.subr.mxu0 0.0
    %2141 = vmatpush1.msra.mxu0 0.0
    %2142 = vmatprep.subr.mxu0 0.0
    %2143 = vmatpush1.msra.mxu0 0.0
    %2144 = vmatprep.subr.mxu0 0.0
    %2145 = vmatpush1.msra.mxu0 0.0
    %2146 = vmatprep.subr.mxu0 0.0
    %2147 = vmatpush1.msra.mxu0 0.0
    %2148 = vmatprep.subr.mxu0 0.0
    %2149 = vmatpush1.msra.mxu0 0.0
    %2150 = vmatprep.subr.mxu0 0.0
    %2151 = vmatpush1.msra.mxu0 0.0
    %2152 = vmatprep.subr.mxu0 0.0
    %2153 = vmatpush1.msra.mxu0 0.0
    %2154 = vmatprep.subr.mxu0 0.0
    %2155 = vmatpush1.msra.mxu0 0.0
    %2156 = vmatprep.subr.mxu0 0.0
    %2157 = vmatpush1.msra.mxu0 0.0
    %2158 = vmatprep.subr.mxu0 0.0
    %2159 = vmatpush1.msra.mxu0 0.0
    %2160 = vmatprep.subr.mxu0 0.0
    %2161 = vmatpush1.msra.mxu0 0.0
    %2162 = vmatprep.subr.mxu0 0.0
    %2163 = vmatpush1.msra.mxu0 0.0
    %2164 = vmatprep.subr.mxu0 0.0
    %2165 = vmatpush1.msra.mxu0 0.0
    %2166 = vmatprep.subr.mxu0 0.0
    %2167 = vmatpush1.msra.mxu0 0.0
    %2168 = vmatprep.subr.mxu0 0.0
    %2169 = vmatpush1.msra.mxu0 0.0
    %2170 = vmatprep.subr.mxu0 0.0
    %2171 = vmatpush1.msra.mxu0 0.0
    %2172 = vmatprep.subr.mxu0 0.0
    %2173 = vmatpush1.msra.mxu0 0.0
    %2174 = vmatprep.subr.mxu0 0.0
    %2175 = vmatpush1.msra.mxu0 0.0
    %2176 = vmatprep.subr.mxu0 0.0
    %2177 = vmatpush1.msra.mxu0 0.0
    %2178 = vmatprep.subr.mxu0 0.0
    %2179 = vmatpush1.msra.mxu0 0.0
    %2180 = vmatprep.mubr.f32.mxu0 0.0
    %v2181 = vand.u32 %v88, 4294901760
    %2182 = vmatmul.mubr.f32.gmra.mrb[0].mxu0 %v2181
    %v2183 = vpop.f32.mrb[0].mxu0
    %v2184 = vadd.f32 %v2101, %v2183
    %v2185 = vpop.f32.mrb[0].mxu0
    %2186 = vdwg.mxu0
    %2187 = vmatprep.subr.mxu0 0.0
    %v2188 = vand.u32 %v1773, 4294901760
    %2189 = vmatpush1.msra.mxu0 %v2188
    %2190 = vmatprep.subr.mxu0 0.0
    %v2191 = vand.u32 %v1774, 4294901760
    %2192 = vmatpush1.msra.mxu0 %v2191
    %2193 = vmatprep.subr.mxu0 0.0
    %v2194 = vand.u32 %v1775, 4294901760
    %2195 = vmatpush1.msra.mxu0 %v2194
    %2196 = vmatprep.subr.mxu0 0.0
    %v2197 = vand.u32 %v1776, 4294901760
    %2198 = vmatpush1.msra.mxu0 %v2197
    %2199 = vmatprep.subr.mxu0 0.0
    %2200 = vmatpush1.msra.mxu0 0.0
    %2201 = vmatprep.subr.mxu0 0.0
    %2202 = vmatpush1.msra.mxu0 0.0
    %2203 = vmatprep.subr.mxu0 0.0
    %2204 = vmatpush1.msra.mxu0 0.0
    %2205 = vmatprep.subr.mxu0 0.0
    %2206 = vmatpush1.msra.mxu0 0.0
    %2207 = vmatprep.subr.mxu0 0.0
    %2208 = vmatpush1.msra.mxu0 0.0
    %2209 = vmatprep.subr.mxu0 0.0
    %2210 = vmatpush1.msra.mxu0 0.0
    %2211 = vmatprep.subr.mxu0 0.0
    %2212 = vmatpush1.msra.mxu0 0.0
    %2213 = vmatprep.subr.mxu0 0.0
    %2214 = vmatpush1.msra.mxu0 0.0
    %2215 = vmatprep.subr.mxu0 0.0
    %2216 = vmatpush1.msra.mxu0 0.0
    %2217 = vmatprep.subr.mxu0 0.0
    %2218 = vmatpush1.msra.mxu0 0.0
    %2219 = vmatprep.subr.mxu0 0.0
    %2220 = vmatpush1.msra.mxu0 0.0
    %2221 = vmatprep.subr.mxu0 0.0
    %2222 = vmatpush1.msra.mxu0 0.0
    %2223 = vmatprep.subr.mxu0 0.0
    %2224 = vmatpush1.msra.mxu0 0.0
    %2225 = vmatprep.subr.mxu0 0.0
    %2226 = vmatpush1.msra.mxu0 0.0
    %2227 = vmatprep.subr.mxu0 0.0
    %2228 = vmatpush1.msra.mxu0 0.0
    %2229 = vmatprep.subr.mxu0 0.0
    %2230 = vmatpush1.msra.mxu0 0.0
    %2231 = vmatprep.subr.mxu0 0.0
    %2232 = vmatpush1.msra.mxu0 0.0
    %2233 = vmatprep.subr.mxu0 0.0
    %2234 = vmatpush1.msra.mxu0 0.0
    %2235 = vmatprep.subr.mxu0 0.0
    %2236 = vmatpush1.msra.mxu0 0.0
    %2237 = vmatprep.subr.mxu0 0.0
    %2238 = vmatpush1.msra.mxu0 0.0
    %2239 = vmatprep.subr.mxu0 0.0
    %2240 = vmatpush1.msra.mxu0 0.0
    %2241 = vmatprep.subr.mxu0 0.0
    %2242 = vmatpush1.msra.mxu0 0.0
    %2243 = vmatprep.subr.mxu0 0.0
    %2244 = vmatpush1.msra.mxu0 0.0
    %2245 = vmatprep.subr.mxu0 0.0
    %2246 = vmatpush1.msra.mxu0 0.0
    %2247 = vmatprep.subr.mxu0 0.0
    %2248 = vmatpush1.msra.mxu0 0.0
    %2249 = vmatprep.subr.mxu0 0.0
    %2250 = vmatpush1.msra.mxu0 0.0
    %2251 = vmatprep.subr.mxu0 0.0
    %2252 = vmatpush1.msra.mxu0 0.0
    %2253 = vmatprep.subr.mxu0 0.0
    %2254 = vmatpush1.msra.mxu0 0.0
    %2255 = vmatprep.mubr.f32.mxu0 0.0
    %v2256 = vand.u32 %v88, 4294901760
    %2257 = vmatmul.mubr.f32.gmra.mrb[0].mxu0 %v2256
    %v2258 = vpop.f32.mrb[0].mxu0
    %v2259 = vadd.f32 %v2184, %v2258
    %v2260 = vpop.f32.mrb[0].mxu0
    %2261 = vdwg.mxu0
    %vm2262 = vcmp.eq.f32.partialorder %v2259, 1.0
    %vm2263 = vmand %vm575, %vm2262
    %vm2264 = vmxor %vm2263, 1
    %vm2265 = vmand %vm1758, %vm2264
    %vm2266 = vcmp.eq.f32.partialorder %v2259, 0.0
    %vm2267 = vmand %vm580, %vm2266
    %vm2268 = vmxor %vm2267, 1
    %vm2269 = vmand %vm2265, %vm2268
    %v2270 = vsub.f32 %v2259, %v55
    %v2271 = vmul.f32 %v2270, %v2270
    %v2272 = vadd.f32 %v2271, 1.0
    %v2274 = vrot.slane %v2271, 1
    %v2276 = vadd.f32 %v2272, %v2274
    %v2277 = vrot.slane %v2271, 2
    %v2279 = vadd.f32 %v2276, %v2277
    %v2280 = vrcp.pop %v2279
    %v2281 = vmul.f32 %v2279, %v2280
    %v2282 = vsub.f32 2.0, %v2281
    %v2283 = vmul.f32 %v2280, %v2282
    %v2284 = vsel %vm2269, 1, 0
    %v2285 = vcvt.s32.f32 %v2284
    %v2287 = vrot.slane %v2283, 1
    %v2289 = vmul.f32 %v2285, %v2287
    %v2290 = vmax.f32 %v2259, 0.0
    %v2291 = vadd.f32 %v606, %v2290
    %vm2292 = vcmp.eq.f32.partialorder %v2291, 0.0
    %v2293 = vsel %vm2292, %v611, 0.0
    %vm2294 = vcmp.eq.f32.partialorder %v2291, 1.0
    %v2295 = vsel %vm2294, %v615, %v2293
    %vm2296 = vcmp.eq.f32.partialorder %v2291, 2.0
    %v2297 = vsel %vm2296, %v619, %v2295
    %vm2298 = vcmp.eq.f32.partialorder %v2291, 3.0
    %v2299 = vsel %vm2298, %v623, %v2297
    %vm2300 = vcmp.eq.f32.partialorder %v2291, 4.0
    %v2301 = vsel %vm2300, %v627, %v2299
    %vm2302 = vcmp.eq.f32.partialorder %v2291, 5.0
    %v2303 = vsel %vm2302, %v631, %v2301
    %vm2304 = vcmp.eq.f32.partialorder %v2291, 6.0
    %v2305 = vsel %vm2304, %v635, %v2303
    %vm2306 = vcmp.eq.f32.partialorder %v2291, 7.0
    %v2307 = vsel %vm2306, %v639, %v2305
    %vm2308 = vcmp.eq.f32.partialorder %v2291, 8.0
    %v2309 = vsel %vm2308, %v643, %v2307
    %v2310 = vmul.f32 %v2309, %v2289
    %v2311 = vadd.f32 %v1756, %v2310
    %s2312 = sld [smem:[#allocation8 + $0x9]]
    %v2313 = vstv %s2312
    %v2314 = vsel %vm575, %v2313, 0.0
    %s2315 = sld [smem:[#allocation8 + $0xa]]
    %v2316 = vstv %s2315
    %v2317 = vsel %vm580, %v2316, %v2314
    %vm2318 = vcmp.eq.f32.partialorder %v55, 2.0
    %s2319 = sld [smem:[#allocation8 + $0xb]]
    %v2320 = vstv %s2319
    %v2321 = vsel %vm2318, %v2320, %v2317
    %v2322 = vadd.f32 %v2311, %v2321
    %vm2323 = vcmp.ge.f32.partialorder %v55, 0.0
    %vm2324 = vcmp.ne.f32.partialorder %v55, 2.0
    %vm2325 = vmand %vm2323, %vm2324
    %v2326 = vsel %vm2325, 1, 0
    %v2327 = vcvt.s32.f32 %v2326
    %v2328 = vmul.f32 %v2322, %v2327
    %v2330 = vrot.slane %v2327, 7
    %vm2332 = vcmask 1040384
    %v2333 = vsel %vm2332, %v2328, %v2330
    %2334 = vst [vmem:[#allocation9] sm:$0x3] %v2333
    // Predicated region
    $region30: #{tpu_custom_call.1} parent=1 // pred_check
      _
    $region31: #{tpu_custom_call.1} parent=1 // pred_check_branch
      %2336 = sbr.rel (0) target = $region33
    $region32: #{tpu_custom_call.1} parent=1 // pred_region
      %s2338 = ssub.s32 32, 32
      %2339 = vsyncadd [#allocation4], %s2338
      %s2341 = sshll.u32 [#allocation9], 4
      %s2342 = int_to_ptr.vmem [resolvable:$true] %s2341
      %2344 = dma.vmem_to_hbm [thread:$0]  %s2342, 32, %s4, [#allocation4]
    $region33: #{tpu_custom_call.1} parent=1 // pred_fallthru
      _
    // Predicated region
    $region34: #{tpu_custom_call.1} parent=1 // pred_check
      _
    $region35: #{tpu_custom_call.1} parent=1 // pred_check_branch
      %2346 = sbr.rel (0) target = $region37
    $region36: #{tpu_custom_call.1} parent=1 // pred_region
      %2347 = dma.done [#allocation4], 32
    $region37: #{tpu_custom_call.1} parent=1 // pred_fallthru
      _
    %2348 = vsyncpa [#allocation3], 1
    %2349 = vsyncpa [#allocation7], 1
    %2350 = vsyncpa [#allocation4], 1
    %2351 = vsyncpa [#allocation5], 1

</llo_original>
